<compile_context>
chip_gen: v7x
topology: tpu7x:2x2x1
jax: 0.10.0
libtpu: 0.0.40
codegen_flags: <defaults>
</compile_context>

<pallas_src>
import math
import numpy as np

import jax
import jax.numpy as jnp
from jax.experimental import pallas as pl
from jax.experimental.pallas import tpu as pltpu

D_MODEL = 64
EPS = 1e-6
_VMEM_LIMIT = 16 * 1024 * 1024  # actual need is a few MiB; safe on v7x (64 MiB)


# ----------------------------------------------------------------------------
# Phase 1 kernel: accumulate KV_ext = [K^T V | k_sum | 0] over L tiles
# ----------------------------------------------------------------------------
def _kv_kernel(ctx_ref, enc_ref, wk_ref, bk_ref, wv_ref, bv_ref,
               kv_ref, acc_ref):
    t = pl.program_id(1)

    @pl.when(t == 0)
    def _():
        acc_ref[...] = jnp.zeros_like(acc_ref)

    ctx = ctx_ref[0]                                   # (TL, 64) bf16
    enc = enc_ref[0].astype(jnp.bfloat16)              # (TL, 64) bf16

    # K projection + feature map (elu(x)+1), math in f32.
    k = jnp.dot(ctx, wk_ref[...], preferred_element_type=jnp.float32) + bk_ref[...]
    K = jnp.where(k > 0, k + 1.0, jnp.exp(k)).astype(jnp.bfloat16)    # (TL, 64)

    # V_ext projection: columns 0..63 = V, column 64 = 1 (ones column folds
    # k_sum into the same MXU accumulation), columns 65..127 = 0.
    ve = (jnp.dot(enc, wv_ref[...], preferred_element_type=jnp.float32)
          + bv_ref[...]).astype(jnp.bfloat16)                          # (TL, 128)

    # acc[d, m] += sum_s K[s, d] * V_ext[s, m]  (contract over sequence axis)
    acc_ref[...] += jax.lax.dot_general(
        K, ve, (((0,), (0,)), ((), ())), preferred_element_type=jnp.float32)

    @pl.when(t == pl.num_programs(1) - 1)
    def _():
        kv_ref[0] = acc_ref[...]


# ----------------------------------------------------------------------------
# Phase 2 kernel (lane-dense): Q proj -> attention (Wo pre-fused) -> residual
#   ctx/enc/out tiles are (TL2, 128): packed pairs of sequence rows.
# ----------------------------------------------------------------------------
def _attn_kernel(gamma_ref, ctx_ref, enc_ref, kvw_ref, ks_ref,
                 wq_ref, bq_ref, bo_ref, out_ref):
    ctx = ctx_ref[0]                                    # (TL2, 128) bf16
    enc = enc_ref[0]                                    # (TL2, 128) f32

    # Packed Q projection via block-diagonal diag(Wq, Wq).
    q = jnp.dot(ctx, wq_ref[...], preferred_element_type=jnp.float32) + bq_ref[...]
    Q = jnp.where(q > 0, q + 1.0, jnp.exp(q)).astype(jnp.bfloat16)     # (TL2, 128)

    # Numerator (Wo already fused into KVW) and lane-broadcast denominator,
    # both produced directly in the packed 128-lane layout (no lane slicing,
    # no cross-lane broadcast work).
    num = jnp.dot(Q, kvw_ref[0], preferred_element_type=jnp.float32)   # (TL2, 128)
    den = jnp.dot(Q, ks_ref[0], preferred_element_type=jnp.float32)    # (TL2, 128)

    z = pl.reciprocal(den + EPS, approx=True)                          # EUP slot
    proj = num * z + bo_ref[...]                                       # (TL2, 128)

    out_ref[0] = enc + gamma_ref[0] * proj                             # unmasked vst


# ----------------------------------------------------------------------------
# Wrapper
# ----------------------------------------------------------------------------
def _pick_tile(L, max_tile, align=16):
    """Largest tile <= max_tile dividing L, preferring 16-sublane alignment."""
    cap = min(L, max_tile)
    for a in (align, 8):
        start = (cap // a) * a
        for t in range(start, a - 1, -a):
            if t > 0 and L % t == 0:
                return t
    # TODO(synk): no sublane-aligned divisor <= max_tile (awkward/prime L);
    # falling back to one whole-L block.  Robust fix is a cdiv grid + masked
    # tail; the fallback can exceed VMEM for very large L.
    return L


def cga_pallas(ctx_seq, enc_seq, params, seq_tile=2048):
    """ctx_seq / enc_seq: (N, L, 64) float32. Returns (N, L, 64) float32."""
    N, L, C = ctx_seq.shape
    assert C == D_MODEL
    # TODO(synk): packed lane-dense phase 2 requires even L (H*W even).
    assert L % 2 == 0, "CGA Pallas kernel requires an even sequence length"
    gamma, wq, bq, wk, bk, wv, bv, wo, bo = params

    TL1 = _pick_tile(L, seq_tile, align=16)             # phase-1 tile over L
    nT1 = L // TL1
    L2 = L // 2
    TL2 = _pick_tile(L2, max(seq_tile // 2, 16), align=16)  # phase-2 tile over L//2
    nT2 = L2 // TL2

    # bf16 operands for the MXU; enc stays f32 (residual path).
    ctx_b = ctx_seq.astype(jnp.bfloat16)
    wk_b = wk.astype(jnp.bfloat16)
    # Extended V weight/bias: column 64 is a constant-1 column -> k_sum folded
    # into the KV matmul; columns 65..127 zero padding (lane-dense RHS).
    wv_ext = jnp.concatenate([wv, jnp.zeros((C, C), jnp.float32)],
                             axis=1).astype(jnp.bfloat16)              # (64, 128)
    bv_ext = jnp.concatenate(
        [bv, jnp.ones((1, 1), jnp.float32), jnp.zeros((1, C - 1), jnp.float32)],
        axis=1)                                                        # (1, 128)

    # ---- Phase 1: KV_ext = [K^T V | k_sum | 0] per batch element ----------
    kv_ext = pl.pallas_call(
        _kv_kernel,
        out_shape=jax.ShapeDtypeStruct((N, C, 2 * C), jnp.float32),
        grid=(N, nT1),
        in_specs=[pl.BlockSpec((1, TL1, C), lambda n, t: (n, t, 0)),
                  pl.BlockSpec((1, TL1, C), lambda n, t: (n, t, 0)),
                  pl.BlockSpec((C, C), lambda n, t: (0, 0)),
                  pl.BlockSpec((1, C), lambda n, t: (0, 0)),
                  pl.BlockSpec((C, 2 * C), lambda n, t: (0, 0)),
                  pl.BlockSpec((1, 2 * C), lambda n, t: (0, 0))],
        out_specs=pl.BlockSpec((1, C, 2 * C), lambda n, t: (n, 0, 0)),
        scratch_shapes=[pltpu.VMEM((C, 2 * C), jnp.float32)],
        compiler_params=pltpu.CompilerParams(
            dimension_semantics=("parallel", "arbitrary"),
            vmem_limit_bytes=_VMEM_LIMIT),
    )(ctx_b, enc_seq, wk_b, bk, wv_ext, bv_ext)

    # ---- Per-batch weight fusion (tiny; fuses under jit) -------------------
    kv = kv_ext[:, :, :C]                               # (N, 64, 64): K^T V
    ksum = kv_ext[:, :, C:C + 1]                        # (N, 64, 1)

    # Fuse Wo into KV (z is a per-row scalar, so it commutes with Wo).
    kvw = jnp.einsum('ndm,mc->ndc', kv, wo)             # (N, 64, 64) f32
    zn = jnp.zeros_like(kvw)
    kvw2 = jnp.concatenate(
        [jnp.concatenate([kvw, zn], axis=2),
         jnp.concatenate([zn, kvw], axis=2)], axis=1).astype(jnp.bfloat16)  # (N,128,128)

    # Lane-broadcast k_sum weight: DEN = Q_packed @ ks2 yields the softmax
    # denominator replicated across the matching 64-lane half of each row.
    ksb = jnp.broadcast_to(ksum, (N, C, C))
    zb = jnp.zeros((N, C, C), jnp.float32)
    ks2 = jnp.concatenate(
        [jnp.concatenate([ksb, zb], axis=2),
         jnp.concatenate([zb, ksb], axis=2)], axis=1).astype(jnp.bfloat16)  # (N,128,128)

    # Block-diagonal / duplicated static weights for the packed layout.
    zw = jnp.zeros((C, C), jnp.float32)
    wq2 = jnp.concatenate(
        [jnp.concatenate([wq, zw], axis=1),
         jnp.concatenate([zw, wq], axis=1)], axis=0).astype(jnp.bfloat16)   # (128,128)
    bq2 = jnp.concatenate([bq, bq], axis=1)                                 # (1, 128)
    bo2 = jnp.concatenate([bo, bo], axis=1)                                 # (1, 128)

    # Free contiguous-memory reshapes to the packed (N, L//2, 128) layout.
    ctx_p = ctx_b.reshape(N, L2, 2 * C)
    enc_p = enc_seq.reshape(N, L2, 2 * C)

    # ---- Phase 2: lane-dense streamed attention + residual -----------------
    out_p = pl.pallas_call(
        _attn_kernel,
        out_shape=jax.ShapeDtypeStruct((N, L2, 2 * C), jnp.float32),
        grid=(N, nT2),
        in_specs=[
            pl.BlockSpec(memory_space=pltpu.MemorySpace.SMEM),           # gamma
            pl.BlockSpec((1, TL2, 2 * C), lambda n, t: (n, t, 0)),       # ctx packed
            pl.BlockSpec((1, TL2, 2 * C), lambda n, t: (n, t, 0)),       # enc packed
            pl.BlockSpec((1, 2 * C, 2 * C), lambda n, t: (n, 0, 0)),     # KVW (per n)
            pl.BlockSpec((1, 2 * C, 2 * C), lambda n, t: (n, 0, 0)),     # ksum (per n)
            pl.BlockSpec((2 * C, 2 * C), lambda n, t: (0, 0)),           # Wq block-diag
            pl.BlockSpec((1, 2 * C), lambda n, t: (0, 0)),               # bq dup
            pl.BlockSpec((1, 2 * C), lambda n, t: (0, 0)),               # bo dup
        ],
        out_specs=pl.BlockSpec((1, TL2, 2 * C), lambda n, t: (n, t, 0)),
        compiler_params=pltpu.CompilerParams(
            dimension_semantics=("parallel", "parallel"),
            vmem_limit_bytes=_VMEM_LIMIT),
    )(gamma, ctx_p, enc_p, kvw2, ks2, wq2, bq2, bo2)

    return out_p.reshape(N, L, C)


# ----------------------------------------------------------------------------
# Glue: LoFTR-style sinusoidal position encoding (plain JAX)
# ----------------------------------------------------------------------------
def position_encoding_sine(d_model, H, W):
    # TODO(synk): PositionEncodingSine was not included in the reference
    # source; this is the standard LoFTR implementation (additive sin/cos).
    y_pos = jnp.cumsum(jnp.ones((H, W), jnp.float32), axis=0)
    x_pos = jnp.cumsum(jnp.ones((H, W), jnp.float32), axis=1)
    div_term = jnp.exp(jnp.arange(0, d_model // 2, 2, dtype=jnp.float32)
                       * (-math.log(10000.0) / (d_model // 2)))
    div_term = div_term[:, None, None]
    pe = jnp.zeros((d_model, H, W), jnp.float32)
    pe = pe.at[0::4].set(jnp.sin(x_pos[None] * div_term))
    pe = pe.at[1::4].set(jnp.cos(x_pos[None] * div_term))
    pe = pe.at[2::4].set(jnp.sin(y_pos[None] * div_term))
    pe = pe.at[3::4].set(jnp.cos(y_pos[None] * div_term))
    return pe[None]  # (1, d_model, H, W)


def cga_forward(context_nchw, encoded_nchw, params, seq_tile=2048):
    """Full CGA forward. Inputs are NCHW (PyTorch convention)."""
    N, C, H, W = context_nchw.shape
    pe = position_encoding_sine(C, H, W)
    ctx = context_nchw + pe
    ctx_seq = jnp.transpose(ctx, (0, 2, 3, 1)).reshape(N, H * W, C)
    enc_seq = jnp.transpose(encoded_nchw, (0, 2, 3, 1)).reshape(N, H * W, C)
    out_seq = cga_pallas(ctx_seq, enc_seq, params, seq_tile=seq_tile)
    return jnp.transpose(out_seq.reshape(N, H, W, C), (0, 3, 1, 2))


# jit the whole forward so transposes, f32->bf16 casts, PE add and the
# per-batch weight packing fuse (no extra materialized HBM round trips).
cga_forward_jit = jax.jit(cga_forward, static_argnames=("seq_tile",))


# ----------------------------------------------------------------------------
# Pure-JAX f32 reference (mirrors the PyTorch einsum formulation)
# ----------------------------------------------------------------------------
def cga_reference(context_nchw, encoded_nchw, params):
    gamma, wq, bq, wk, bk, wv, bv, wo, bo = params
    N, C, H, W = context_nchw.shape
    pe = position_encoding_sine(C, H, W)
    ctx = jnp.transpose(context_nchw + pe, (0, 2, 3, 1)).reshape(N, H * W, C)
    enc = jnp.transpose(encoded_nchw, (0, 2, 3, 1)).reshape(N, H * W, C)

    q = ctx @ wq + bq
    k = ctx @ wk + bk
    v = enc @ wv + bv
    feat = lambda x: jnp.where(x > 0, x + 1.0, jnp.exp(x))
    Q, K = feat(q), feat(k)
    Qh, Kh, Vh = Q[:, :, None, :], K[:, :, None, :], v[:, :, None, :]
    KV = jnp.einsum('nshd,nshm->nhmd', Kh, Vh)
    Z = 1.0 / (jnp.einsum('nlhd,nhd->nlh', Qh, Kh.sum(axis=1)) + EPS)
    Vout = jnp.einsum('nlhd,nhmd,nlh->nlhm', Qh, KV, Z).reshape(N, H * W, C)
    attn = Vout @ wo + bo
    out = enc + gamma[0] * attn
    return jnp.transpose(out.reshape(N, H, W, C), (0, 3, 1, 2))


# ----------------------------------------------------------------------------
# Deterministic parameter init (shapes from the module's __init__)
# ----------------------------------------------------------------------------
def init_params(key):
    ks = jax.random.split(key, 8)
    bound = 1.0 / math.sqrt(D_MODEL)
    u = lambda k, shape: jax.random.uniform(k, shape, jnp.float32, -bound, bound)
    # Weights stored pre-transposed to (in, out) so the kernels do x @ W + b.
    wq, bq = u(ks[0], (D_MODEL, D_MODEL)), u(ks[1], (1, D_MODEL))
    wk, bk = u(ks[2], (D_MODEL, D_MODEL)), u(ks[3], (1, D_MODEL))
    wv, bv = u(ks[4], (D_MODEL, D_MODEL)), u(ks[5], (1, D_MODEL))
    wo, bo = u(ks[6], (D_MODEL, D_MODEL)), u(ks[7], (1, D_MODEL))
    # NOTE: PyTorch initializes gamma = 0 (which zeroes the attention branch);
    # use a nonzero deterministic value so the kernel path is exercised.
    gamma = jnp.array([0.5], dtype=jnp.float32)
    return (gamma, wq, bq, wk, bk, wv, bv, wo, bo)


if __name__ == "__main__":
    key = jax.random.PRNGKey(0)
    k_ctx, k_enc, k_par = jax.random.split(key, 3)

    # C is fixed to 64 by the module; H=W=16 -> L=256.  seq_tile=128 forces
    # two L tiles in phase 1 and two packed tiles in phase 2, exercising the
    # multi-tile accumulation / streaming paths.
    N, C, H, W = 2, D_MODEL, 16, 16
    context = jax.random.normal(k_ctx, (N, C, H, W), jnp.float32)
    encoded = jax.random.normal(k_enc, (N, C, H, W), jnp.float32)
    params = init_params(k_par)

    out = jax.block_until_ready(cga_forward_jit(context, encoded, params,
                                                seq_tile=128))
    ref = jax.block_until_ready(cga_reference(context, encoded, params))

    assert out.shape == (N, C, H, W)
    # Precision contract: bf16 MXU matmuls (incl. the bf16 k_sum / KVW
    # per-batch weights) and the approximate reciprocal introduce ~1% relative
    # error vs. the pure-f32 reference.
    np.testing.assert_allclose(np.asarray(out), np.asarray(ref),
                               rtol=5e-2, atol=5e-2)
    print("KERNEL_OK")
</pallas_src>

<mosaic_0001>
module attributes {stable_mosaic.version = 11 : i64} {
  func.func @_kv_kernel(%arg0: i32, %arg1: i32, %arg2: memref<1x128x64xbf16, #tpu.memory_space<vmem>>, %arg3: memref<1x128x64xf32, #tpu.memory_space<vmem>>, %arg4: memref<64x64xbf16, #tpu.memory_space<vmem>>, %arg5: memref<1x64xf32, #tpu.memory_space<vmem>>, %arg6: memref<64x128xbf16, #tpu.memory_space<vmem>>, %arg7: memref<1x128xf32, #tpu.memory_space<vmem>>, %arg8: memref<1x64x128xf32, #tpu.memory_space<vmem>>, %arg9: memref<64x128xf32, #tpu.memory_space<vmem>>) attributes {dimension_semantics = [#tpu.dimension_semantics<parallel>, #tpu.dimension_semantics<arbitrary>], iteration_bounds = array<i64: 2, 2>, scalar_prefetch = 0 : i64, scratch_operands = 1 : i64, tpu.core_type = #tpu.core_type<tc>, window_params = [{transform_indices = @transform_0, window_bounds = array<i64: 1, 128, 64>}, {transform_indices = @transform_1, window_bounds = array<i64: 1, 128, 64>}, {pipeline_mode = #tpu.pipeline_mode<synchronous>, transform_indices = @transform_2, window_bounds = array<i64: 64, 64>}, {pipeline_mode = #tpu.pipeline_mode<synchronous>, transform_indices = @transform_3, window_bounds = array<i64: 1, 64>}, {pipeline_mode = #tpu.pipeline_mode<synchronous>, transform_indices = @transform_4, window_bounds = array<i64: 64, 128>}, {pipeline_mode = #tpu.pipeline_mode<synchronous>, transform_indices = @transform_5, window_bounds = array<i64: 1, 128>}, {transform_indices = @transform_6, window_bounds = array<i64: 1, 64, 128>}]} {
    %c0_i32 = arith.constant 0 : i32
    %0 = arith.cmpi eq, %arg1, %c0_i32 : i32
    %1 = arith.extui %0 : i1 to i32
    %c0_i32_0 = arith.constant 0 : i32
    %2 = arith.cmpi ne, %1, %c0_i32_0 : i32
    scf.if %2 {
      %cst_23 = arith.constant 0.000000e+00 : f32
      %33 = vector.broadcast %cst_23 : f32 to vector<64x128xf32>
      %c0_24 = arith.constant 0 : index
      %c0_25 = arith.constant 0 : index
      %34 = vector.load %arg9[%c0_24, %c0_25] : memref<64x128xf32, #tpu.memory_space<vmem>>, vector<64x128xf32>
      tpu.vector_store %arg9[%c0_24, %c0_25], %33 {strides = array<i32>} : memref<64x128xf32, #tpu.memory_space<vmem>>, vector<64x128xf32>,
    } else {
    }
    %c0 = arith.constant 0 : index
    %c0_1 = arith.constant 0 : index
    %c0_2 = arith.constant 0 : index
    %3 = vector.load %arg2[%c0, %c0_1, %c0_2] : memref<1x128x64xbf16, #tpu.memory_space<vmem>>, vector<1x128x64xbf16>
    %4 = vector.shape_cast %3 : vector<1x128x64xbf16> to vector<128x64xbf16>
    %c0_3 = arith.constant 0 : index
    %c0_4 = arith.constant 0 : index
    %c0_5 = arith.constant 0 : index
    %5 = vector.load %arg3[%c0_3, %c0_4, %c0_5] : memref<1x128x64xf32, #tpu.memory_space<vmem>>, vector<1x128x64xf32>
    %6 = vector.shape_cast %5 : vector<1x128x64xf32> to vector<128x64xf32>
    %7 = arith.truncf %6 : vector<128x64xf32> to vector<128x64xbf16>
    %c0_6 = arith.constant 0 : index
    %c0_7 = arith.constant 0 : index
    %8 = vector.load %arg4[%c0_6, %c0_7] : memref<64x64xbf16, #tpu.memory_space<vmem>>, vector<64x64xbf16>
    %cst = arith.constant dense<0.000000e+00> : vector<128x64xf32>
    %9 = tpu.matmul %4, %8, %cst {dimension_numbers = #tpu.dot_dimension_numbers<[1], [0], [0], [1], [0, 0, 1, 1], [], []>} : vector<128x64xbf16>, vector<64x64xbf16>, vector<128x64xf32> -> vector<128x64xf32>
    %c0_8 = arith.constant 0 : index
    %c0_9 = arith.constant 0 : index
    %10 = vector.load %arg5[%c0_8, %c0_9] : memref<1x64xf32, #tpu.memory_space<vmem>>, vector<1x64xf32>
    %11 = vector.broadcast %10 : vector<1x64xf32> to vector<128x64xf32>
    %12 = arith.addf %9, %11 : vector<128x64xf32>
    %cst_10 = arith.constant 0.000000e+00 : f32
    %13 = vector.broadcast %cst_10 : f32 to vector<128x64xf32>
    %14 = arith.cmpf ogt, %12, %13 : vector<128x64xf32>
    %cst_11 = arith.constant 1.000000e+00 : f32
    %15 = vector.broadcast %cst_11 : f32 to vector<128x64xf32>
    %16 = arith.addf %12, %15 : vector<128x64xf32>
    %17 = math.exp %12 : vector<128x64xf32>
    %18 = arith.select %14, %16, %17 : vector<128x64xi1>, vector<128x64xf32>
    %19 = arith.truncf %18 : vector<128x64xf32> to vector<128x64xbf16>
    %c0_12 = arith.constant 0 : index
    %c0_13 = arith.constant 0 : index
    %20 = vector.load %arg6[%c0_12, %c0_13] : memref<64x128xbf16, #tpu.memory_space<vmem>>, vector<64x128xbf16>
    %cst_14 = arith.constant dense<0.000000e+00> : vector<128x128xf32>
    %21 = tpu.matmul %7, %20, %cst_14 {dimension_numbers = #tpu.dot_dimension_numbers<[1], [0], [0], [1], [0, 0, 1, 1], [], []>} : vector<128x64xbf16>, vector<64x128xbf16>, vector<128x128xf32> -> vector<128x128xf32>
    %c0_15 = arith.constant 0 : index
    %c0_16 = arith.constant 0 : index
    %22 = vector.load %arg7[%c0_15, %c0_16] : memref<1x128xf32, #tpu.memory_space<vmem>>, vector<1x128xf32>
    %23 = vector.broadcast %22 : vector<1x128xf32> to vector<128x128xf32>
    %24 = arith.addf %21, %23 : vector<128x128xf32>
    %25 = arith.truncf %24 : vector<128x128xf32> to vector<128x128xbf16>
    %c0_17 = arith.constant 0 : index
    %c0_18 = arith.constant 0 : index
    %26 = vector.load %arg9[%c0_17, %c0_18] : memref<64x128xf32, #tpu.memory_space<vmem>>, vector<64x128xf32>
    %cst_19 = arith.constant dense<0.000000e+00> : vector<64x128xf32>
    %27 = tpu.matmul %19, %25, %cst_19 {dimension_numbers = #tpu.dot_dimension_numbers<[0], [0], [1], [1], [0, 1, 1, 1], [], []>} : vector<128x64xbf16>, vector<128x128xbf16>, vector<64x128xf32> -> vector<64x128xf32>
    %28 = arith.addf %26, %27 : vector<64x128xf32>
    %c0_20 = arith.constant 0 : index
    %c0_21 = arith.constant 0 : index
    %29 = vector.load %arg9[%c0_20, %c0_21] : memref<64x128xf32, #tpu.memory_space<vmem>>, vector<64x128xf32>
    tpu.vector_store %arg9[%c0_20, %c0_21], %28 {strides = array<i32>} : memref<64x128xf32, #tpu.memory_space<vmem>>, vector<64x128xf32>,
    %c1_i32 = arith.constant 1 : i32
    %30 = arith.cmpi eq, %arg1, %c1_i32 : i32
    %31 = arith.extui %30 : i1 to i32
    %c0_i32_22 = arith.constant 0 : i32
    %32 = arith.cmpi ne, %31, %c0_i32_22 : i32
    scf.if %32 {
      %c0_23 = arith.constant 0 : index
      %c0_24 = arith.constant 0 : index
      %33 = vector.load %arg9[%c0_23, %c0_24] : memref<64x128xf32, #tpu.memory_space<vmem>>, vector<64x128xf32>
      %c0_25 = arith.constant 0 : index
      %c0_26 = arith.constant 0 : index
      %c0_27 = arith.constant 0 : index
      %34 = vector.load %arg8[%c0_25, %c0_26, %c0_27] : memref<1x64x128xf32, #tpu.memory_space<vmem>>, vector<1x64x128xf32>
      %35 = vector.shape_cast %34 : vector<1x64x128xf32> to vector<64x128xf32>
      %36 = vector.shape_cast %33 : vector<64x128xf32> to vector<1x64x128xf32>
      tpu.vector_store %arg8[%c0_25, %c0_26, %c0_27], %36 {strides = array<i32>} : memref<1x64x128xf32, #tpu.memory_space<vmem>>, vector<1x64x128xf32>,
    } else {
    }
    return
  }
  func.func @transform_0(%arg0: i32, %arg1: i32) -> (i32, i32, i32) {
    %c0_i32 = arith.constant 0 : i32
    %c0_i32_0 = arith.constant 0 : i32
    return %arg0, %arg1, %c0_i32 : i32, i32, i32
  }
  func.func @transform_1(%arg0: i32, %arg1: i32) -> (i32, i32, i32) {
    %c0_i32 = arith.constant 0 : i32
    %c0_i32_0 = arith.constant 0 : i32
    return %arg0, %arg1, %c0_i32 : i32, i32, i32
  }
  func.func @transform_2(%arg0: i32, %arg1: i32) -> (i32, i32) {
    %c0_i32 = arith.constant 0 : i32
    %c0_i32_0 = arith.constant 0 : i32
    %c0_i32_1 = arith.constant 0 : i32
    return %c0_i32, %c0_i32_0 : i32, i32
  }
  func.func @transform_3(%arg0: i32, %arg1: i32) -> (i32, i32) {
    %c0_i32 = arith.constant 0 : i32
    %c0_i32_0 = arith.constant 0 : i32
    %c0_i32_1 = arith.constant 0 : i32
    return %c0_i32, %c0_i32_0 : i32, i32
  }
  func.func @transform_4(%arg0: i32, %arg1: i32) -> (i32, i32) {
    %c0_i32 = arith.constant 0 : i32
    %c0_i32_0 = arith.constant 0 : i32
    %c0_i32_1 = arith.constant 0 : i32
    return %c0_i32, %c0_i32_0 : i32, i32
  }
  func.func @transform_5(%arg0: i32, %arg1: i32) -> (i32, i32) {
    %c0_i32 = arith.constant 0 : i32
    %c0_i32_0 = arith.constant 0 : i32
    %c0_i32_1 = arith.constant 0 : i32
    return %c0_i32, %c0_i32_0 : i32, i32
  }
  func.func @transform_6(%arg0: i32, %arg1: i32) -> (i32, i32, i32) {
    %c0_i32 = arith.constant 0 : i32
    %c0_i32_0 = arith.constant 0 : i32
    %c0_i32_1 = arith.constant 0 : i32
    return %arg0, %c0_i32, %c0_i32_0 : i32, i32, i32
  }
}

module attributes {stable_mosaic.version = 11 : i64} {
  func.func @_attn_kernel(%arg0: i32, %arg1: i32, %arg2: memref<1xf32, #tpu.memory_space<smem>>, %arg3: memref<1x64x128xbf16, #tpu.memory_space<vmem>>, %arg4: memref<1x64x128xf32, #tpu.memory_space<vmem>>, %arg5: memref<1x128x128xbf16, #tpu.memory_space<vmem>>, %arg6: memref<1x128x128xbf16, #tpu.memory_space<vmem>>, %arg7: memref<128x128xbf16, #tpu.memory_space<vmem>>, %arg8: memref<1x128xf32, #tpu.memory_space<vmem>>, %arg9: memref<1x128xf32, #tpu.memory_space<vmem>>, %arg10: memref<1x64x128xf32, #tpu.memory_space<vmem>>) attributes {dimension_semantics = [#tpu.dimension_semantics<parallel>, #tpu.dimension_semantics<parallel>], iteration_bounds = array<i64: 2, 2>, scalar_prefetch = 0 : i64, scratch_operands = 0 : i64, tpu.core_type = #tpu.core_type<tc>, window_params = [{transform_indices = @transform_0, window_bounds = array<i64: 1>}, {transform_indices = @transform_1, window_bounds = array<i64: 1, 64, 128>}, {transform_indices = @transform_2, window_bounds = array<i64: 1, 64, 128>}, {transform_indices = @transform_3, window_bounds = array<i64: 1, 128, 128>}, {transform_indices = @transform_4, window_bounds = array<i64: 1, 128, 128>}, {pipeline_mode = #tpu.pipeline_mode<synchronous>, transform_indices = @transform_5, window_bounds = array<i64: 128, 128>}, {pipeline_mode = #tpu.pipeline_mode<synchronous>, transform_indices = @transform_6, window_bounds = array<i64: 1, 128>}, {pipeline_mode = #tpu.pipeline_mode<synchronous>, transform_indices = @transform_7, window_bounds = array<i64: 1, 128>}, {transform_indices = @transform_8, window_bounds = array<i64: 1, 64, 128>}]} {
    %c0 = arith.constant 0 : index
    %c0_0 = arith.constant 0 : index
    %c0_1 = arith.constant 0 : index
    %0 = vector.load %arg3[%c0, %c0_0, %c0_1] : memref<1x64x128xbf16, #tpu.memory_space<vmem>>, vector<1x64x128xbf16>
    %1 = vector.shape_cast %0 : vector<1x64x128xbf16> to vector<64x128xbf16>
    %c0_2 = arith.constant 0 : index
    %c0_3 = arith.constant 0 : index
    %c0_4 = arith.constant 0 : index
    %2 = vector.load %arg4[%c0_2, %c0_3, %c0_4] : memref<1x64x128xf32, #tpu.memory_space<vmem>>, vector<1x64x128xf32>
    %3 = vector.shape_cast %2 : vector<1x64x128xf32> to vector<64x128xf32>
    %c0_5 = arith.constant 0 : index
    %c0_6 = arith.constant 0 : index
    %4 = vector.load %arg7[%c0_5, %c0_6] : memref<128x128xbf16, #tpu.memory_space<vmem>>, vector<128x128xbf16>
    %cst = arith.constant dense<0.000000e+00> : vector<64x128xf32>
    %5 = tpu.matmul %1, %4, %cst {dimension_numbers = #tpu.dot_dimension_numbers<[1], [0], [0], [1], [0, 0, 1, 1], [], []>} : vector<64x128xbf16>, vector<128x128xbf16>, vector<64x128xf32> -> vector<64x128xf32>
    %c0_7 = arith.constant 0 : index
    %c0_8 = arith.constant 0 : index
    %6 = vector.load %arg8[%c0_7, %c0_8] : memref<1x128xf32, #tpu.memory_space<vmem>>, vector<1x128xf32>
    %7 = vector.broadcast %6 : vector<1x128xf32> to vector<64x128xf32>
    %8 = arith.addf %5, %7 : vector<64x128xf32>
    %cst_9 = arith.constant 0.000000e+00 : f32
    %9 = vector.broadcast %cst_9 : f32 to vector<64x128xf32>
    %10 = arith.cmpf ogt, %8, %9 : vector<64x128xf32>
    %cst_10 = arith.constant 1.000000e+00 : f32
    %11 = vector.broadcast %cst_10 : f32 to vector<64x128xf32>
    %12 = arith.addf %8, %11 : vector<64x128xf32>
    %13 = math.exp %8 : vector<64x128xf32>
    %14 = arith.select %10, %12, %13 : vector<64x128xi1>, vector<64x128xf32>
    %15 = arith.truncf %14 : vector<64x128xf32> to vector<64x128xbf16>
    %c0_11 = arith.constant 0 : index
    %c0_12 = arith.constant 0 : index
    %c0_13 = arith.constant 0 : index
    %16 = vector.load %arg5[%c0_11, %c0_12, %c0_13] : memref<1x128x128xbf16, #tpu.memory_space<vmem>>, vector<1x128x128xbf16>
    %17 = vector.shape_cast %16 : vector<1x128x128xbf16> to vector<128x128xbf16>
    %cst_14 = arith.constant dense<0.000000e+00> : vector<64x128xf32>
    %18 = tpu.matmul %15, %17, %cst_14 {dimension_numbers = #tpu.dot_dimension_numbers<[1], [0], [0], [1], [0, 0, 1, 1], [], []>} : vector<64x128xbf16>, vector<128x128xbf16>, vector<64x128xf32> -> vector<64x128xf32>
    %c0_15 = arith.constant 0 : index
    %c0_16 = arith.constant 0 : index
    %c0_17 = arith.constant 0 : index
    %19 = vector.load %arg6[%c0_15, %c0_16, %c0_17] : memref<1x128x128xbf16, #tpu.memory_space<vmem>>, vector<1x128x128xbf16>
    %20 = vector.shape_cast %19 : vector<1x128x128xbf16> to vector<128x128xbf16>
    %cst_18 = arith.constant dense<0.000000e+00> : vector<64x128xf32>
    %21 = tpu.matmul %15, %20, %cst_18 {dimension_numbers = #tpu.dot_dimension_numbers<[1], [0], [0], [1], [0, 0, 1, 1], [], []>} : vector<64x128xbf16>, vector<128x128xbf16>, vector<64x128xf32> -> vector<64x128xf32>
    %cst_19 = arith.constant 9.99999997E-7 : f32
    %22 = vector.broadcast %cst_19 : f32 to vector<64x128xf32>
    %23 = arith.addf %21, %22 : vector<64x128xf32>
    %24 = tpu.reciprocal %23 {approx = true} : vector<64x128xf32> -> vector<64x128xf32>
    %25 = arith.mulf %18, %24 : vector<64x128xf32>
    %c0_20 = arith.constant 0 : index
    %c0_21 = arith.constant 0 : index
    %26 = vector.load %arg9[%c0_20, %c0_21] : memref<1x128xf32, #tpu.memory_space<vmem>>, vector<1x128xf32>
    %27 = vector.broadcast %26 : vector<1x128xf32> to vector<64x128xf32>
    %28 = arith.addf %25, %27 : vector<64x128xf32>
    %c0_22 = arith.constant 0 : index
    %29 = memref.load %arg2[%c0_22] : memref<1xf32, #tpu.memory_space<smem>>
    %30 = vector.broadcast %29 : f32 to vector<64x128xf32>
    %31 = arith.mulf %30, %28 : vector<64x128xf32>
    %32 = arith.addf %3, %31 : vector<64x128xf32>
    %c0_23 = arith.constant 0 : index
    %c0_24 = arith.constant 0 : index
    %c0_25 = arith.constant 0 : index
    %33 = vector.load %arg10[%c0_23, %c0_24, %c0_25] : memref<1x64x128xf32, #tpu.memory_space<vmem>>, vector<1x64x128xf32>
    %34 = vector.shape_cast %33 : vector<1x64x128xf32> to vector<64x128xf32>
    %35 = vector.shape_cast %32 : vector<64x128xf32> to vector<1x64x128xf32>
    tpu.vector_store %arg10[%c0_23, %c0_24, %c0_25], %35 {strides = array<i32>} : memref<1x64x128xf32, #tpu.memory_space<vmem>>, vector<1x64x128xf32>,
    return
  }
  func.func @transform_0(%arg0: i32, %arg1: i32) -> i32 {
    %c0_i32 = arith.constant 0 : i32
    %c0_i32_0 = arith.constant 0 : i32
    return %c0_i32 : i32
  }
  func.func @transform_1(%arg0: i32, %arg1: i32) -> (i32, i32, i32) {
    %c0_i32 = arith.constant 0 : i32
    %c0_i32_0 = arith.constant 0 : i32
    return %arg0, %arg1, %c0_i32 : i32, i32, i32
  }
  func.func @transform_2(%arg0: i32, %arg1: i32) -> (i32, i32, i32) {
    %c0_i32 = arith.constant 0 : i32
    %c0_i32_0 = arith.constant 0 : i32
    return %arg0, %arg1, %c0_i32 : i32, i32, i32
  }
  func.func @transform_3(%arg0: i32, %arg1: i32) -> (i32, i32, i32) {
    %c0_i32 = arith.constant 0 : i32
    %c0_i32_0 = arith.constant 0 : i32
    %c0_i32_1 = arith.constant 0 : i32
    return %arg0, %c0_i32, %c0_i32_0 : i32, i32, i32
  }
  func.func @transform_4(%arg0: i32, %arg1: i32) -> (i32, i32, i32) {
    %c0_i32 = arith.constant 0 : i32
    %c0_i32_0 = arith.constant 0 : i32
    %c0_i32_1 = arith.constant 0 : i32
    return %arg0, %c0_i32, %c0_i32_0 : i32, i32, i32
  }
  func.func @transform_5(%arg0: i32, %arg1: i32) -> (i32, i32) {
    %c0_i32 = arith.constant 0 : i32
    %c0_i32_0 = arith.constant 0 : i32
    %c0_i32_1 = arith.constant 0 : i32
    return %c0_i32, %c0_i32_0 : i32, i32
  }
  func.func @transform_6(%arg0: i32, %arg1: i32) -> (i32, i32) {
    %c0_i32 = arith.constant 0 : i32
    %c0_i32_0 = arith.constant 0 : i32
    %c0_i32_1 = arith.constant 0 : i32
    return %c0_i32, %c0_i32_0 : i32, i32
  }
  func.func @transform_7(%arg0: i32, %arg1: i32) -> (i32, i32) {
    %c0_i32 = arith.constant 0 : i32
    %c0_i32_0 = arith.constant 0 : i32
    %c0_i32_1 = arith.constant 0 : i32
    return %c0_i32, %c0_i32_0 : i32, i32
  }
  func.func @transform_8(%arg0: i32, %arg1: i32) -> (i32, i32, i32) {
    %c0_i32 = arith.constant 0 : i32
    %c0_i32_0 = arith.constant 0 : i32
    return %arg0, %arg1, %c0_i32 : i32, i32, i32
  }
}

</mosaic_0001>

<llo_original>
// kernel: cga_forward.2
$region0: #{cga_forward.2}
  #allocation0 [shape = 'u32[]', space=smem, size = 0x4, offset = 0x4, fixed_abs, tag = 'smem constant byte address 0x4 - core index']
  #allocation1 [shape = 'u32[144,128]{1,0:T(1,128)}', space=vmem, size = 0x12000, scoped, tag = 'internal scratch']
  #allocation2 [shape = 'f32[64,128]{1,0:T(8,128)}', space=vmem, size = 0x8000, scoped, tag = 'scratch operand']
  %s0 = inlined_call_operand.vmem [shape: bf16[2,256,64], index: 0, kind: input, shape index: {}]
  %s1 = inlined_call_operand.vmem [shape: f32[2,256,64], index: 1, kind: input, shape index: {}]
  %s2 = inlined_call_operand.vmem [shape: bf16[64,64], index: 2, kind: input, shape index: {}]
  %s3 = inlined_call_operand.vmem [shape: f32[1,64], index: 3, kind: input, shape index: {}]
  %s4 = inlined_call_operand.vmem [shape: bf16[64,128], index: 4, kind: input, shape index: {}]
  %s5 = inlined_call_operand.vmem [shape: f32[1,128], index: 5, kind: input, shape index: {}]
  %s6 = inlined_call_operand.vmem [shape: f32[2,64,128], index: 6, kind: output, shape index: {}]
  %s7 = sld [smem:[#allocation0]]
  $region65: #{cga_forward.2} parent=0
    _
  %s9 = ssub.s32 1, %s7
  %s10 = scalar_select 0, %s9, %s7
  loop: start=0, step=1, limit=6
  $region2: #{cga_forward.2} parent=0 // loop_pre_header
    _
  $region3: #{cga_forward.2} parent=0 // loop_header
    %s12 = sphi 0, %s16
    %p13 = scmp.ge.s32.totalorder %s12, 6
    %s19 = sphi 0, %s31
    %s20 = sphi 0, %s27
    %s21 = sphi 0, %s19
    %s22 = sphi 0, %s20
    %s23 = sphi 0, %s21
    %s24 = sphi 0, %s22
    %s36 = sphi 0, %s38
    %s39 = sphi 0, %s36
    %s40 = sphi 0, %s39
    %s56 = sphi 0, %s40
    %s64 = sphi 0, %s66
    %s67 = sphi 0, %s64
    %s68 = sphi 0, %s67
    %s84 = sphi 0, %s68
    %s88 = sphi 0, %s88
    %s90 = sphi 0, %s88
    %s91 = sphi 0, %s90
    %s105 = sphi 0, %s91
    %s109 = sphi 0, %s109
    %s111 = sphi 0, %s109
    %s112 = sphi 0, %s111
    %s126 = sphi 0, %s112
    %s130 = sphi 0, %s130
    %s132 = sphi 0, %s130
    %s133 = sphi 0, %s132
    %s147 = sphi 0, %s133
    %s151 = sphi 0, %s151
    %s153 = sphi 0, %s151
    %s154 = sphi 0, %s153
    %s168 = sphi 0, %s154
    %s174 = sphi 0, %s176
    %s177 = sphi 0, %s174
    %s178 = sphi 0, %s177
    %s194 = sphi 0, %s178
  $region4: #{cga_forward.2} parent=0 // loop_header_branch
    %15 = sbr.rel (%p13) target = $region8
  $region5: #{cga_forward.2} parent=0 // loop_body
    %s17 = ssub.s32 %s12, 1
    %s18 = ssub.s32 %s12, 2
    %s25 = sadd.s32 1, %s20
    %p26 = scmp.ge.s32.totalorder %s25, 2
    %s27 = scalar_select %p26, 0, %s25
    %s28 = sadd.s32 1, %s19
    %s29 = scalar_select %p26, %s28, %s19
    %p30 = scmp.ge.s32.totalorder %s29, 2
    %s31 = scalar_select %p30, 0, %s29
    %s32 = ssub.s32 %s19, %s31
    %s33 = ssub.s32 %s20, %s27
    %s34 = sor.u32 %s32, %s33
    %p35 = scmp.eq.s32.totalorder %s34, 0
    %s37 = sadd.s32 %s36, 1
    %s38 = scalar_select %p35, %s36, %s37
    %p41 = pneg %p35
    %p42 = scmp.eq.s32.totalorder %s12, 3
    %p43 = por %p41, %p42
    %p44 = scmp.ne.s32.totalorder %s36, %s39
    %p45 = scmp.eq.s32.totalorder %s12, 0
    %p46 = por %p44, %p45
    %p47 = scmp.ne.s32.totalorder %s36, %s39
    %p48 = scmp.eq.s32.totalorder %s17, 3
    %p49 = por %p47, %p48
    %p50 = scmp.ne.s32.totalorder %s39, %s40
    %p51 = scmp.eq.s32.totalorder %s17, 0
    %p52 = por %p50, %p51
    %p53 = scmp.ne.s32.totalorder %s39, %s40
    %p54 = scmp.eq.s32.totalorder %s18, 3
    %p55 = por %p53, %p54
    %p57 = scmp.ne.s32.totalorder %s40, %s56
    %p58 = scmp.eq.s32.totalorder %s18, 0
    %p59 = por %p57, %p58
    %s60 = ssub.s32 %s19, %s31
    %s61 = ssub.s32 %s20, %s27
    %s62 = sor.u32 %s60, %s61
    %p63 = scmp.eq.s32.totalorder %s62, 0
    %s65 = sadd.s32 %s64, 1
    %s66 = scalar_select %p63, %s64, %s65
    %p69 = pneg %p63
    %p70 = scmp.eq.s32.totalorder %s12, 3
    %p71 = por %p69, %p70
    %p72 = scmp.ne.s32.totalorder %s64, %s67
    %p73 = scmp.eq.s32.totalorder %s12, 0
    %p74 = por %p72, %p73
    %p75 = scmp.ne.s32.totalorder %s64, %s67
    %p76 = scmp.eq.s32.totalorder %s17, 3
    %p77 = por %p75, %p76
    %p78 = scmp.ne.s32.totalorder %s67, %s68
    %p79 = scmp.eq.s32.totalorder %s17, 0
    %p80 = por %p78, %p79
    %p81 = scmp.ne.s32.totalorder %s67, %s68
    %p82 = scmp.eq.s32.totalorder %s18, 3
    %p83 = por %p81, %p82
    %p85 = scmp.ne.s32.totalorder %s68, %s84
    %p86 = scmp.eq.s32.totalorder %s18, 0
    %p87 = por %p85, %p86
    %s89 = sadd.s32 %s88, 1
    %p92 = scmp.eq.s32.totalorder %s12, 3
    %p93 = scmp.ne.s32.totalorder %s88, %s90
    %p94 = scmp.eq.s32.totalorder %s12, 0
    %p95 = por %p93, %p94
    %p96 = scmp.ne.s32.totalorder %s88, %s90
    %p97 = scmp.eq.s32.totalorder %s17, 3
    %p98 = por %p96, %p97
    %p99 = scmp.ne.s32.totalorder %s90, %s91
    %p100 = scmp.eq.s32.totalorder %s17, 0
    %p101 = por %p99, %p100
    %p102 = scmp.ne.s32.totalorder %s90, %s91
    %p103 = scmp.eq.s32.totalorder %s18, 3
    %p104 = por %p102, %p103
    %p106 = scmp.ne.s32.totalorder %s91, %s105
    %p107 = scmp.eq.s32.totalorder %s18, 0
    %p108 = por %p106, %p107
    %s110 = sadd.s32 %s109, 1
    %p113 = scmp.eq.s32.totalorder %s12, 3
    %p114 = scmp.ne.s32.totalorder %s109, %s111
    %p115 = scmp.eq.s32.totalorder %s12, 0
    %p116 = por %p114, %p115
    %p117 = scmp.ne.s32.totalorder %s109, %s111
    %p118 = scmp.eq.s32.totalorder %s17, 3
    %p119 = por %p117, %p118
    %p120 = scmp.ne.s32.totalorder %s111, %s112
    %p121 = scmp.eq.s32.totalorder %s17, 0
    %p122 = por %p120, %p121
    %p123 = scmp.ne.s32.totalorder %s111, %s112
    %p124 = scmp.eq.s32.totalorder %s18, 3
    %p125 = por %p123, %p124
    %p127 = scmp.ne.s32.totalorder %s112, %s126
    %p128 = scmp.eq.s32.totalorder %s18, 0
    %p129 = por %p127, %p128
    %s131 = sadd.s32 %s130, 1
    %p134 = scmp.eq.s32.totalorder %s12, 3
    %p135 = scmp.ne.s32.totalorder %s130, %s132
    %p136 = scmp.eq.s32.totalorder %s12, 0
    %p137 = por %p135, %p136
    %p138 = scmp.ne.s32.totalorder %s130, %s132
    %p139 = scmp.eq.s32.totalorder %s17, 3
    %p140 = por %p138, %p139
    %p141 = scmp.ne.s32.totalorder %s132, %s133
    %p142 = scmp.eq.s32.totalorder %s17, 0
    %p143 = por %p141, %p142
    %p144 = scmp.ne.s32.totalorder %s132, %s133
    %p145 = scmp.eq.s32.totalorder %s18, 3
    %p146 = por %p144, %p145
    %p148 = scmp.ne.s32.totalorder %s133, %s147
    %p149 = scmp.eq.s32.totalorder %s18, 0
    %p150 = por %p148, %p149
    %s152 = sadd.s32 %s151, 1
    %p155 = scmp.eq.s32.totalorder %s12, 3
    %p156 = scmp.ne.s32.totalorder %s151, %s153
    %p157 = scmp.eq.s32.totalorder %s12, 0
    %p158 = por %p156, %p157
    %p159 = scmp.ne.s32.totalorder %s151, %s153
    %p160 = scmp.eq.s32.totalorder %s17, 3
    %p161 = por %p159, %p160
    %p162 = scmp.ne.s32.totalorder %s153, %s154
    %p163 = scmp.eq.s32.totalorder %s17, 0
    %p164 = por %p162, %p163
    %p165 = scmp.ne.s32.totalorder %s153, %s154
    %p166 = scmp.eq.s32.totalorder %s18, 3
    %p167 = por %p165, %p166
    %p169 = scmp.ne.s32.totalorder %s154, %s168
    %p170 = scmp.eq.s32.totalorder %s18, 0
    %p171 = por %p169, %p170
    %s172 = ssub.s32 %s19, %s31
    %p173 = scmp.eq.s32.totalorder %s172, 0
    %s175 = sadd.s32 %s174, 1
    %s176 = scalar_select %p173, %s174, %s175
    %p179 = pneg %p173
    %p180 = scmp.eq.s32.totalorder %s12, 3
    %p181 = por %p179, %p180
    %p182 = scmp.ne.s32.totalorder %s174, %s177
    %p183 = scmp.eq.s32.totalorder %s12, 0
    %p184 = por %p182, %p183
    %p185 = scmp.ne.s32.totalorder %s174, %s177
    %p186 = scmp.eq.s32.totalorder %s17, 3
    %p187 = por %p185, %p186
    %p188 = scmp.ne.s32.totalorder %s177, %s178
    %p189 = scmp.eq.s32.totalorder %s17, 0
    %p190 = por %p188, %p189
    %p191 = scmp.ne.s32.totalorder %s177, %s178
    %p192 = scmp.eq.s32.totalorder %s18, 3
    %p193 = por %p191, %p192
    %p195 = scmp.ne.s32.totalorder %s178, %s194
    %p196 = scmp.eq.s32.totalorder %s18, 0
    %p197 = por %p195, %p196
    %p198 = scmp.le.s32.totalorder 1, %s12
    %p199 = scmp.lt.s32.totalorder %s12, 5
    %p200 = pnand %p198, %p199
    %p201 = pneg %p200
    // Predicated region
    $region9: #{cga_forward.2} parent=5 // pred_check
      _
    $region10: #{cga_forward.2} parent=5 // pred_check_branch
      %203 = sbr.rel (%p200) target = $region12
    $region11: #{cga_forward.2} parent=5 // pred_region
      %s204 = ssub.s32 %s12, 1
      // Predicated region
      $region13: #{cga_forward.2} parent=11 // pred_check
        %p205 = pneg %p101
      $region14: #{cga_forward.2} parent=11 // pred_check_branch
        %207 = sbr.rel (%p205) target = $region16
      $region15: #{cga_forward.2} parent=11 // pred_region
        _
      $region16: #{cga_forward.2} parent=11 // pred_fallthru
        _
      // Predicated region
      $region17: #{cga_forward.2} parent=11 // pred_check
        %p208 = pneg %p122
      $region18: #{cga_forward.2} parent=11 // pred_check_branch
        %210 = sbr.rel (%p208) target = $region20
      $region19: #{cga_forward.2} parent=11 // pred_region
        _
      $region20: #{cga_forward.2} parent=11 // pred_fallthru
        _
      // Predicated region
      $region21: #{cga_forward.2} parent=11 // pred_check
        %p211 = pneg %p143
      $region22: #{cga_forward.2} parent=11 // pred_check_branch
        %213 = sbr.rel (%p211) target = $region24
      $region23: #{cga_forward.2} parent=11 // pred_region
        _
      $region24: #{cga_forward.2} parent=11 // pred_fallthru
        _
      // Predicated region
      $region25: #{cga_forward.2} parent=11 // pred_check
        %p214 = pneg %p164
      $region26: #{cga_forward.2} parent=11 // pred_check_branch
        %216 = sbr.rel (%p214) target = $region28
      $region27: #{cga_forward.2} parent=11 // pred_region
        _
      $region28: #{cga_forward.2} parent=11 // pred_fallthru
        _
    $region12: #{cga_forward.2} parent=5 // pred_fallthru
      _
    %p217 = scmp.lt.s32.totalorder %s12, 4
    // Predicated region
    $region29: #{cga_forward.2} parent=5 // pred_check
      %p218 = pneg %p217
    $region30: #{cga_forward.2} parent=5 // pred_check_branch
      %220 = sbr.rel (%p218) target = $region32
    $region31: #{cga_forward.2} parent=5 // pred_region
      // Predicated region
      $region33: #{cga_forward.2} parent=31 // pred_check
        %p221 = pneg %p46
      $region34: #{cga_forward.2} parent=31 // pred_check_branch
        %223 = sbr.rel (%p221) target = $region36
      $region35: #{cga_forward.2} parent=31 // pred_region
        %s224 = smul.u32 16, %s20
        %p225 = scmp.lt.s32.totalorder %s19, 1
        %s226 = scalar_select %p225, %s19, 1
        %p227 = scmp.lt.s32.totalorder %s224, 31
        %s228 = scalar_select %p227, %s224, 31
        %s229 = smul.addr %s226, 32
        %s230 = sadd.s32 %s228, %s229
        %s231 = smul.addr %s230, 4
        %s232 = scalar_lea.vmem %s0, %s231
        %s233 = smul.u32 16, %s20
      $region36: #{cga_forward.2} parent=31 // pred_fallthru
        _
      // Predicated region
      $region37: #{cga_forward.2} parent=31 // pred_check
        %p234 = pneg %p74
      $region38: #{cga_forward.2} parent=31 // pred_check_branch
        %236 = sbr.rel (%p234) target = $region40
      $region39: #{cga_forward.2} parent=31 // pred_region
        %s237 = smul.u32 16, %s20
        %p238 = scmp.lt.s32.totalorder %s19, 1
        %s239 = scalar_select %p238, %s19, 1
        %p240 = scmp.lt.s32.totalorder %s237, 31
        %s241 = scalar_select %p240, %s237, 31
        %s242 = smul.addr %s239, 32
        %s243 = sadd.s32 %s241, %s242
        %s244 = smul.addr %s243, 8
        %s245 = scalar_lea.vmem %s1, %s244
        %s246 = smul.u32 16, %s20
      $region40: #{cga_forward.2} parent=31 // pred_fallthru
        _
    $region32: #{cga_forward.2} parent=5 // pred_fallthru
      _
    %p247 = scmp.le.s32.totalorder 1, %s12
    %p248 = scmp.lt.s32.totalorder %s12, 5
    %p249 = pnand %p247, %p248
    %p250 = pneg %p249
    // Predicated region
    $region41: #{cga_forward.2} parent=5 // pred_check
      _
    $region42: #{cga_forward.2} parent=5 // pred_check_branch
      %252 = sbr.rel (%p249) target = $region44
    $region43: #{cga_forward.2} parent=5 // pred_region
      %s253 = ssub.s32 %s12, 1
      %s254 = smul.u32 16, %s22
      %p255 = scmp.lt.s32.totalorder %s21, 1
      %s256 = scalar_select %p255, %s21, 1
      %p257 = scmp.lt.s32.totalorder %s254, 31
      %s258 = scalar_select %p257, %s254, 31
      %s259 = smul.addr %s256, 32
      %s260 = sadd.s32 %s258, %s259
      %s261 = smul.addr %s260, 4
      %s262 = scalar_lea.vmem %s0, %s261
      %p263 = pneg %p52
      %p264 = pneg %p49
      %s265 = smul.u32 16, %s22
      %p266 = scmp.lt.s32.totalorder %s21, 1
      %s267 = scalar_select %p266, %s21, 1
      %p268 = scmp.lt.s32.totalorder %s265, 31
      %s269 = scalar_select %p268, %s265, 31
      %s270 = smul.addr %s267, 32
      %s271 = sadd.s32 %s269, %s270
      %s272 = smul.addr %s271, 8
      %s273 = scalar_lea.vmem %s1, %s272
      %p274 = pneg %p80
      %p275 = pneg %p77
      %p276 = pneg %p101
      %p277 = pneg %p98
      %p278 = pneg %p122
      %p279 = pneg %p119
      %p280 = pneg %p143
      %p281 = pneg %p140
      %p282 = pneg %p164
      %p283 = pneg %p161
      %p284 = pneg %p190
      %p285 = pneg %p187
      %p286 = scmp.lt.s32.totalorder %s21, 1
      %s287 = scalar_select %p286, %s21, 1
      %s288 = smul.addr %s287, 8
      %s289 = smul.addr %s288, 8
      %s290 = scalar_lea.vmem %s6, %s289
      %s291 = smul.u32 16, %s22
      %p292 = scmp.lt.s32.totalorder %s21, 1
      %s293 = scalar_select %p292, %s21, 1
      %p294 = scmp.lt.s32.totalorder %s291, 31
      %s295 = scalar_select %p294, %s291, 31
      %s296 = smul.addr %s293, 32
      %s297 = sadd.s32 %s295, %s296
      %s298 = smul.addr %s297, 4
      %s299 = scalar_lea.vmem %s0, %s298
      %s300 = smul.u32 16, %s22
      %s301 = smul.u32 16, %s22
      %p302 = scmp.lt.s32.totalorder %s21, 1
      %s303 = scalar_select %p302, %s21, 1
      %p304 = scmp.lt.s32.totalorder %s301, 31
      %s305 = scalar_select %p304, %s301, 31
      %s306 = smul.addr %s303, 32
      %s307 = sadd.s32 %s305, %s306
      %s308 = smul.addr %s307, 8
      %s309 = scalar_lea.vmem %s1, %s308
      %s310 = smul.u32 16, %s22
      %p311 = scmp.lt.s32.totalorder %s21, 1
      %s312 = scalar_select %p311, %s21, 1
      %s313 = smul.addr %s312, 8
      %s314 = smul.addr %s313, 8
      %s315 = scalar_lea.vmem %s6, %s314
      %p317 = scmp.eq.s32.totalorder %s22, 0
      // Predicated region
      $region45: #{cga_forward.2} parent=43 // pred_check
        %p318 = pneg %p317
      $region46: #{cga_forward.2} parent=43 // pred_check_branch
        %320 = sbr.rel (%p318) target = $region48
      $region47: #{cga_forward.2} parent=43 // pred_region
        %321 = vst [vmem:[#allocation2] sm:$0xff] 0.0
        %322 = vst [vmem:[#allocation2 + $0x8] sm:$0xff] 0.0
        %323 = vst [vmem:[#allocation2 + $0x10] sm:$0xff] 0.0
        %324 = vst [vmem:[#allocation2 + $0x18] sm:$0xff] 0.0
        %325 = vst [vmem:[#allocation2 + $0x20] sm:$0xff] 0.0
        %326 = vst [vmem:[#allocation2 + $0x28] sm:$0xff] 0.0
        %327 = vst [vmem:[#allocation2 + $0x30] sm:$0xff] 0.0
        %328 = vst [vmem:[#allocation2 + $0x38] sm:$0xff] 0.0
      $region48: #{cga_forward.2} parent=43 // pred_fallthru
        _
      %v329 = vld [vmem:[%s299] sm:$0xf]
      %v330 = vld [vmem:[%s299 + $0x4] sm:$0xf]
      %v331 = vld [vmem:[%s299 + $0x8] sm:$0xf]
      %v332 = vld [vmem:[%s299 + $0xc] sm:$0xf]
      %v333 = vld [vmem:[%s299 + $0x10] sm:$0xf]
      %v334 = vld [vmem:[%s299 + $0x14] sm:$0xf]
      %v335 = vld [vmem:[%s299 + $0x18] sm:$0xf]
      %v336 = vld [vmem:[%s299 + $0x1c] sm:$0xf]
      %v337 = vld [vmem:[%s299 + $0x20] sm:$0xf]
      %v338 = vld [vmem:[%s299 + $0x24] sm:$0xf]
      %v339 = vld [vmem:[%s299 + $0x28] sm:$0xf]
      %v340 = vld [vmem:[%s299 + $0x2c] sm:$0xf]
      %v341 = vld [vmem:[%s299 + $0x30] sm:$0xf]
      %v342 = vld [vmem:[%s299 + $0x34] sm:$0xf]
      %v343 = vld [vmem:[%s299 + $0x38] sm:$0xf]
      %v344 = vld [vmem:[%s299 + $0x3c] sm:$0xf]
      %v345 = vld [vmem:[%s309] sm:$0xff]
      %v346 = vld [vmem:[%s309 + $0x8] sm:$0xff]
      %v347 = vld [vmem:[%s309 + $0x10] sm:$0xff]
      %v348 = vld [vmem:[%s309 + $0x18] sm:$0xff]
      %v349 = vld [vmem:[%s309 + $0x20] sm:$0xff]
      %v350 = vld [vmem:[%s309 + $0x28] sm:$0xff]
      %v351 = vld [vmem:[%s309 + $0x30] sm:$0xff]
      %v352 = vld [vmem:[%s309 + $0x38] sm:$0xff]
      %v353 = vld [vmem:[%s309 + $0x40] sm:$0xff]
      %v354 = vld [vmem:[%s309 + $0x48] sm:$0xff]
      %v355 = vld [vmem:[%s309 + $0x50] sm:$0xff]
      %v356 = vld [vmem:[%s309 + $0x58] sm:$0xff]
      %v357 = vld [vmem:[%s309 + $0x60] sm:$0xff]
      %v358 = vld [vmem:[%s309 + $0x68] sm:$0xff]
      %v359 = vld [vmem:[%s309 + $0x70] sm:$0xff]
      %v360 = vld [vmem:[%s309 + $0x78] sm:$0xff]
      %v361 = vpack.c.bf16 %v346, %v345
      %v362 = vpack.c.bf16 %v348, %v347
      %v363 = vpack.c.bf16 %v350, %v349
      %v364 = vpack.c.bf16 %v352, %v351
      %v365 = vpack.c.bf16 %v354, %v353
      %v366 = vpack.c.bf16 %v356, %v355
      %v367 = vpack.c.bf16 %v358, %v357
      %v368 = vpack.c.bf16 %v360, %v359
      %v369 = vld [vmem:[%s2] sm:$0xf]
      %v370 = vld [vmem:[%s2 + $0x4] sm:$0xf]
      %v371 = vld [vmem:[%s2 + $0x8] sm:$0xf]
      %v372 = vld [vmem:[%s2 + $0xc] sm:$0xf]
      %v373 = vld [vmem:[%s2 + $0x10] sm:$0xf]
      %v374 = vld [vmem:[%s2 + $0x14] sm:$0xf]
      %v375 = vld [vmem:[%s2 + $0x18] sm:$0xf]
      %v376 = vld [vmem:[%s2 + $0x1c] sm:$0xf]
      %v377 = vld [vmem:[%s3] sm:$0x1]
      %v379 = vlaneseq
      %v380 = vshrl.u32 %v379, 7
      %v381 = vsub.s32 0, %v380
      %v382 = vrot.slane %v377, %v381
      %v400 = vunpack.c.l.b16 %v329
      %v401 = vunpack.c.l.b16 %v330
      %v402 = vunpack.c.l.b16 %v331
      %v403 = vunpack.c.l.b16 %v332
      %v404 = vunpack.c.l.b16 %v333
      %v405 = vunpack.c.l.b16 %v334
      %v406 = vunpack.c.l.b16 %v335
      %v407 = vunpack.c.l.b16 %v336
      %v408 = vunpack.c.l.b16 %v337
      %v409 = vunpack.c.l.b16 %v338
      %v410 = vunpack.c.l.b16 %v339
      %v411 = vunpack.c.l.b16 %v340
      %v412 = vunpack.c.l.b16 %v341
      %v413 = vunpack.c.l.b16 %v342
      %v414 = vunpack.c.l.b16 %v343
      %v415 = vunpack.c.l.b16 %v344
      %v416 = vpack.c.b16 %v401, %v400
      %v417 = vpack.c.b16 %v403, %v402
      %v418 = vpack.c.b16 %v405, %v404
      %v419 = vpack.c.b16 %v407, %v406
      %v420 = vpack.c.b16 %v409, %v408
      %v421 = vpack.c.b16 %v411, %v410
      %v422 = vpack.c.b16 %v413, %v412
      %v423 = vpack.c.b16 %v415, %v414
      %v432 = vunpack.c.l.b16 %v369
      %v433 = vunpack.c.l.b16 %v370
      %v434 = vunpack.c.l.b16 %v371
      %v435 = vunpack.c.l.b16 %v372
      %v436 = vunpack.c.l.b16 %v373
      %v437 = vunpack.c.l.b16 %v374
      %v438 = vunpack.c.l.b16 %v375
      %v439 = vunpack.c.l.b16 %v376
      %v440 = vpack.c.b16 %v433, %v432
      %v441 = vpack.c.b16 %v435, %v434
      %v442 = vpack.c.b16 %v437, %v436
      %v443 = vpack.c.b16 %v439, %v438
      %vm448 = vcmask 523264
      %v450 = vsel %vm448, %v416, 0
      %v453 = vsel %vm448, %v417, 0
      %v456 = vsel %vm448, %v418, 0
      %v459 = vsel %vm448, %v419, 0
      %v462 = vsel %vm448, %v420, 0
      %v465 = vsel %vm448, %v421, 0
      %v468 = vsel %vm448, %v422, 0
      %v471 = vsel %vm448, %v423, 0
      %473 = vmatprep.subr.bf16.mxu0 0
      %474 = vmatpush1.bf16.msra.mxu0 %v440
      %475 = vmatprep.subr.bf16.mxu0 0
      %476 = vmatpush1.bf16.msra.mxu0 %v441
      %477 = vmatprep.subr.bf16.mxu0 0
      %478 = vmatpush1.bf16.msra.mxu0 %v442
      %479 = vmatprep.subr.bf16.mxu0 0
      %480 = vmatpush1.bf16.msra.mxu0 %v443
      %481 = vmatprep.subr.bf16.mxu0 0
      %482 = vmatpush1.bf16.msra.mxu0 0
      %483 = vmatprep.subr.bf16.mxu0 0
      %484 = vmatpush1.bf16.msra.mxu0 0
      %485 = vmatprep.subr.bf16.mxu0 0
      %486 = vmatpush1.bf16.msra.mxu0 0
      %487 = vmatprep.subr.bf16.mxu0 0
      %488 = vmatpush1.bf16.msra.mxu0 0
      %489 = vmatprep.subr.bf16.mxu0 0
      %490 = vmatpush1.bf16.msra.mxu0 0
      %491 = vmatprep.subr.bf16.mxu0 0
      %492 = vmatpush1.bf16.msra.mxu0 0
      %493 = vmatprep.subr.bf16.mxu0 0
      %494 = vmatpush1.bf16.msra.mxu0 0
      %495 = vmatprep.subr.bf16.mxu0 0
      %496 = vmatpush1.bf16.msra.mxu0 0
      %497 = vmatprep.subr.bf16.mxu0 0
      %498 = vmatpush1.bf16.msra.mxu0 0
      %499 = vmatprep.subr.bf16.mxu0 0
      %500 = vmatpush1.bf16.msra.mxu0 0
      %501 = vmatprep.subr.bf16.mxu0 0
      %502 = vmatpush1.bf16.msra.mxu0 0
      %503 = vmatprep.subr.bf16.mxu0 0
      %504 = vmatpush1.bf16.msra.mxu0 0
      %505 = vmatprep.mubr.bf16.mxu0 0
      %506 = vmatmul.mubr.bf16.gmra.mrb[0].mxu0 %v450
      %v507 = vpop.f32.mrb[0].mxu0
      %v508 = vadd.f32 %v382, %v507
      %v509 = vpop.f32.mrb[0].mxu0
      %v510 = vpop.f32.mrb[0].mxu0
      %v511 = vadd.f32 %v382, %v510
      %v512 = vpop.f32.mrb[0].mxu0
      %513 = vmatprep.mubr.bf16.mxu0 0
      %514 = vmatmul.mubr.bf16.gmra.mrb[0].mxu0 %v453
      %v515 = vpop.f32.mrb[0].mxu0
      %v516 = vadd.f32 %v382, %v515
      %v517 = vpop.f32.mrb[0].mxu0
      %v518 = vpop.f32.mrb[0].mxu0
      %v519 = vadd.f32 %v382, %v518
      %v520 = vpop.f32.mrb[0].mxu0
      %521 = vmatprep.mubr.bf16.mxu0 0
      %522 = vmatmul.mubr.bf16.gmra.mrb[0].mxu0 %v456
      %v523 = vpop.f32.mrb[0].mxu0
      %v524 = vadd.f32 %v382, %v523
      %v525 = vpop.f32.mrb[0].mxu0
      %v526 = vpop.f32.mrb[0].mxu0
      %v527 = vadd.f32 %v382, %v526
      %v528 = vpop.f32.mrb[0].mxu0
      %529 = vmatprep.mubr.bf16.mxu0 0
      %530 = vmatmul.mubr.bf16.gmra.mrb[0].mxu0 %v459
      %v531 = vpop.f32.mrb[0].mxu0
      %v532 = vadd.f32 %v382, %v531
      %v533 = vpop.f32.mrb[0].mxu0
      %v534 = vpop.f32.mrb[0].mxu0
      %v535 = vadd.f32 %v382, %v534
      %v536 = vpop.f32.mrb[0].mxu0
      %537 = vmatprep.mubr.bf16.mxu0 0
      %538 = vmatmul.mubr.bf16.gmra.mrb[0].mxu0 %v462
      %v539 = vpop.f32.mrb[0].mxu0
      %v540 = vadd.f32 %v382, %v539
      %v541 = vpop.f32.mrb[0].mxu0
      %v542 = vpop.f32.mrb[0].mxu0
      %v543 = vadd.f32 %v382, %v542
      %v544 = vpop.f32.mrb[0].mxu0
      %545 = vmatprep.mubr.bf16.mxu0 0
      %546 = vmatmul.mubr.bf16.gmra.mrb[0].mxu0 %v465
      %v547 = vpop.f32.mrb[0].mxu0
      %v548 = vadd.f32 %v382, %v547
      %v549 = vpop.f32.mrb[0].mxu0
      %v550 = vpop.f32.mrb[0].mxu0
      %v551 = vadd.f32 %v382, %v550
      %v552 = vpop.f32.mrb[0].mxu0
      %553 = vmatprep.mubr.bf16.mxu0 0
      %554 = vmatmul.mubr.bf16.gmra.mrb[0].mxu0 %v468
      %v555 = vpop.f32.mrb[0].mxu0
      %v556 = vadd.f32 %v382, %v555
      %v557 = vpop.f32.mrb[0].mxu0
      %v558 = vpop.f32.mrb[0].mxu0
      %v559 = vadd.f32 %v382, %v558
      %v560 = vpop.f32.mrb[0].mxu0
      %561 = vmatprep.mubr.bf16.mxu0 0
      %562 = vmatmul.mubr.bf16.gmra.mrb[0].mxu0 %v471
      %v563 = vpop.f32.mrb[0].mxu0
      %v564 = vadd.f32 %v382, %v563
      %v565 = vpop.f32.mrb[0].mxu0
      %v566 = vpop.f32.mrb[0].mxu0
      %v567 = vadd.f32 %v382, %v566
      %v568 = vpop.f32.mrb[0].mxu0
      %569 = vdwg.mxu0
      %vm570 = vcmp.gt.f32.partialorder %v508, 0.0
      %vm571 = vcmp.gt.f32.partialorder %v511, 0.0
      %vm572 = vcmp.gt.f32.partialorder %v516, 0.0
      %vm573 = vcmp.gt.f32.partialorder %v519, 0.0
      %vm574 = vcmp.gt.f32.partialorder %v524, 0.0
      %vm575 = vcmp.gt.f32.partialorder %v527, 0.0
      %vm576 = vcmp.gt.f32.partialorder %v532, 0.0
      %vm577 = vcmp.gt.f32.partialorder %v535, 0.0
      %vm578 = vcmp.gt.f32.partialorder %v540, 0.0
      %vm579 = vcmp.gt.f32.partialorder %v543, 0.0
      %vm580 = vcmp.gt.f32.partialorder %v548, 0.0
      %vm581 = vcmp.gt.f32.partialorder %v551, 0.0
      %vm582 = vcmp.gt.f32.partialorder %v556, 0.0
      %vm583 = vcmp.gt.f32.partialorder %v559, 0.0
      %vm584 = vcmp.gt.f32.partialorder %v564, 0.0
      %vm585 = vcmp.gt.f32.partialorder %v567, 0.0
      %v586 = vadd.f32 %v508, 1.0
      %v587 = vadd.f32 %v511, 1.0
      %v588 = vadd.f32 %v516, 1.0
      %v589 = vadd.f32 %v519, 1.0
      %v590 = vadd.f32 %v524, 1.0
      %v591 = vadd.f32 %v527, 1.0
      %v592 = vadd.f32 %v532, 1.0
      %v593 = vadd.f32 %v535, 1.0
      %v594 = vadd.f32 %v540, 1.0
      %v595 = vadd.f32 %v543, 1.0
      %v596 = vadd.f32 %v548, 1.0
      %v597 = vadd.f32 %v551, 1.0
      %v598 = vadd.f32 %v556, 1.0
      %v599 = vadd.f32 %v559, 1.0
      %v600 = vadd.f32 %v564, 1.0
      %v601 = vadd.f32 %v567, 1.0
      %v602 = vmul.f32 %v508, 1.442695
      %v603 = vpow.pop %v602
      %v604 = vmul.f32 %v511, 1.442695
      %v605 = vpow.pop %v604
      %v606 = vmul.f32 %v516, 1.442695
      %v607 = vpow.pop %v606
      %v608 = vmul.f32 %v519, 1.442695
      %v609 = vpow.pop %v608
      %v610 = vmul.f32 %v524, 1.442695
      %v611 = vpow.pop %v610
      %v612 = vmul.f32 %v527, 1.442695
      %v613 = vpow.pop %v612
      %v614 = vmul.f32 %v532, 1.442695
      %v615 = vpow.pop %v614
      %v616 = vmul.f32 %v535, 1.442695
      %v617 = vpow.pop %v616
      %v618 = vmul.f32 %v540, 1.442695
      %v619 = vpow.pop %v618
      %v620 = vmul.f32 %v543, 1.442695
      %v621 = vpow.pop %v620
      %v622 = vmul.f32 %v548, 1.442695
      %v623 = vpow.pop %v622
      %v624 = vmul.f32 %v551, 1.442695
      %v625 = vpow.pop %v624
      %v626 = vmul.f32 %v556, 1.442695
      %v627 = vpow.pop %v626
      %v628 = vmul.f32 %v559, 1.442695
      %v629 = vpow.pop %v628
      %v630 = vmul.f32 %v564, 1.442695
      %v631 = vpow.pop %v630
      %v632 = vmul.f32 %v567, 1.442695
      %v633 = vpow.pop %v632
      %v634 = vsel %vm570, %v586, %v603
      %v635 = vsel %vm571, %v587, %v605
      %v636 = vsel %vm572, %v588, %v607
      %v637 = vsel %vm573, %v589, %v609
      %v638 = vsel %vm574, %v590, %v611
      %v639 = vsel %vm575, %v591, %v613
      %v640 = vsel %vm576, %v592, %v615
      %v641 = vsel %vm577, %v593, %v617
      %v642 = vsel %vm578, %v594, %v619
      %v643 = vsel %vm579, %v595, %v621
      %v644 = vsel %vm580, %v596, %v623
      %v645 = vsel %vm581, %v597, %v625
      %v646 = vsel %vm582, %v598, %v627
      %v647 = vsel %vm583, %v599, %v629
      %v648 = vsel %vm584, %v600, %v631
      %v649 = vsel %vm585, %v601, %v633
      %v650 = vpack.c.bf16 %v635, %v634
      %v651 = vpack.c.bf16 %v637, %v636
      %v652 = vpack.c.bf16 %v639, %v638
      %v653 = vpack.c.bf16 %v641, %v640
      %v654 = vpack.c.bf16 %v643, %v642
      %v655 = vpack.c.bf16 %v645, %v644
      %v656 = vpack.c.bf16 %v647, %v646
      %v657 = vpack.c.bf16 %v649, %v648
      %v658 = vld [vmem:[%s4] sm:$0xf]
      %v659 = vld [vmem:[%s4 + $0x4] sm:$0xf]
      %v660 = vld [vmem:[%s4 + $0x8] sm:$0xf]
      %v661 = vld [vmem:[%s4 + $0xc] sm:$0xf]
      %v662 = vld [vmem:[%s4 + $0x10] sm:$0xf]
      %v663 = vld [vmem:[%s4 + $0x14] sm:$0xf]
      %v664 = vld [vmem:[%s4 + $0x18] sm:$0xf]
      %v665 = vld [vmem:[%s4 + $0x1c] sm:$0xf]
      %v666 = vld [vmem:[%s5] sm:$0x1]
      %v668 = vlaneseq
      %v669 = vshrl.u32 %v668, 7
      %v670 = vsub.s32 0, %v669
      %v671 = vrot.slane %v666, %v670
      %v681 = vunpack.c.l.b16 %v658
      %v682 = vunpack.c.l.b16 %v659
      %v683 = vunpack.c.l.b16 %v660
      %v684 = vunpack.c.l.b16 %v661
      %v685 = vunpack.c.l.b16 %v662
      %v686 = vunpack.c.l.b16 %v663
      %v687 = vunpack.c.l.b16 %v664
      %v688 = vunpack.c.l.b16 %v665
      %v689 = vpack.c.b16 %v682, %v681
      %v690 = vpack.c.b16 %v684, %v683
      %v691 = vpack.c.b16 %v686, %v685
      %v692 = vpack.c.b16 %v688, %v687
      %v698 = vsel %vm448, %v361, 0
      %v701 = vsel %vm448, %v362, 0
      %v704 = vsel %vm448, %v363, 0
      %v707 = vsel %vm448, %v364, 0
      %v710 = vsel %vm448, %v365, 0
      %v713 = vsel %vm448, %v366, 0
      %v716 = vsel %vm448, %v367, 0
      %v719 = vsel %vm448, %v368, 0
      %721 = vmatprep.subr.bf16.mxu0 0
      %722 = vmatpush1.bf16.msra.mxu0 %v689
      %723 = vmatprep.subr.bf16.mxu0 0
      %724 = vmatpush1.bf16.msra.mxu0 %v690
      %725 = vmatprep.subr.bf16.mxu0 0
      %726 = vmatpush1.bf16.msra.mxu0 %v691
      %727 = vmatprep.subr.bf16.mxu0 0
      %728 = vmatpush1.bf16.msra.mxu0 %v692
      %729 = vmatprep.subr.bf16.mxu0 0
      %730 = vmatpush1.bf16.msra.mxu0 0
      %731 = vmatprep.subr.bf16.mxu0 0
      %732 = vmatpush1.bf16.msra.mxu0 0
      %733 = vmatprep.subr.bf16.mxu0 0
      %734 = vmatpush1.bf16.msra.mxu0 0
      %735 = vmatprep.subr.bf16.mxu0 0
      %736 = vmatpush1.bf16.msra.mxu0 0
      %737 = vmatprep.subr.bf16.mxu0 0
      %738 = vmatpush1.bf16.msra.mxu0 0
      %739 = vmatprep.subr.bf16.mxu0 0
      %740 = vmatpush1.bf16.msra.mxu0 0
      %741 = vmatprep.subr.bf16.mxu0 0
      %742 = vmatpush1.bf16.msra.mxu0 0
      %743 = vmatprep.subr.bf16.mxu0 0
      %744 = vmatpush1.bf16.msra.mxu0 0
      %745 = vmatprep.subr.bf16.mxu0 0
      %746 = vmatpush1.bf16.msra.mxu0 0
      %747 = vmatprep.subr.bf16.mxu0 0
      %748 = vmatpush1.bf16.msra.mxu0 0
      %749 = vmatprep.subr.bf16.mxu0 0
      %750 = vmatpush1.bf16.msra.mxu0 0
      %751 = vmatprep.subr.bf16.mxu0 0
      %752 = vmatpush1.bf16.msra.mxu0 0
      %753 = vmatprep.mubr.bf16.mxu0 0
      %754 = vmatmul.mubr.bf16.gmra.mrb[0].mxu0 %v698
      %v755 = vpop.f32.mrb[0].mxu0
      %v756 = vadd.f32 %v671, %v755
      %v757 = vpop.f32.mrb[0].mxu0
      %v758 = vpop.f32.mrb[0].mxu0
      %v759 = vadd.f32 %v671, %v758
      %v760 = vpop.f32.mrb[0].mxu0
      %761 = vmatprep.mubr.bf16.mxu0 0
      %762 = vmatmul.mubr.bf16.gmra.mrb[0].mxu0 %v701
      %v763 = vpop.f32.mrb[0].mxu0
      %v764 = vadd.f32 %v671, %v763
      %v765 = vpop.f32.mrb[0].mxu0
      %v766 = vpop.f32.mrb[0].mxu0
      %v767 = vadd.f32 %v671, %v766
      %v768 = vpop.f32.mrb[0].mxu0
      %769 = vmatprep.mubr.bf16.mxu0 0
      %770 = vmatmul.mubr.bf16.gmra.mrb[0].mxu0 %v704
      %v771 = vpop.f32.mrb[0].mxu0
      %v772 = vadd.f32 %v671, %v771
      %v773 = vpop.f32.mrb[0].mxu0
      %v774 = vpop.f32.mrb[0].mxu0
      %v775 = vadd.f32 %v671, %v774
      %v776 = vpop.f32.mrb[0].mxu0
      %777 = vmatprep.mubr.bf16.mxu0 0
      %778 = vmatmul.mubr.bf16.gmra.mrb[0].mxu0 %v707
      %v779 = vpop.f32.mrb[0].mxu0
      %v780 = vadd.f32 %v671, %v779
      %v781 = vpop.f32.mrb[0].mxu0
      %v782 = vpop.f32.mrb[0].mxu0
      %v783 = vadd.f32 %v671, %v782
      %v784 = vpop.f32.mrb[0].mxu0
      %785 = vmatprep.mubr.bf16.mxu0 0
      %786 = vmatmul.mubr.bf16.gmra.mrb[0].mxu0 %v710
      %v787 = vpop.f32.mrb[0].mxu0
      %v788 = vadd.f32 %v671, %v787
      %v789 = vpop.f32.mrb[0].mxu0
      %v790 = vpop.f32.mrb[0].mxu0
      %v791 = vadd.f32 %v671, %v790
      %v792 = vpop.f32.mrb[0].mxu0
      %793 = vmatprep.mubr.bf16.mxu0 0
      %794 = vmatmul.mubr.bf16.gmra.mrb[0].mxu0 %v713
      %v795 = vpop.f32.mrb[0].mxu0
      %v796 = vadd.f32 %v671, %v795
      %v797 = vpop.f32.mrb[0].mxu0
      %v798 = vpop.f32.mrb[0].mxu0
      %v799 = vadd.f32 %v671, %v798
      %v800 = vpop.f32.mrb[0].mxu0
      %801 = vmatprep.mubr.bf16.mxu0 0
      %802 = vmatmul.mubr.bf16.gmra.mrb[0].mxu0 %v716
      %v803 = vpop.f32.mrb[0].mxu0
      %v804 = vadd.f32 %v671, %v803
      %v805 = vpop.f32.mrb[0].mxu0
      %v806 = vpop.f32.mrb[0].mxu0
      %v807 = vadd.f32 %v671, %v806
      %v808 = vpop.f32.mrb[0].mxu0
      %809 = vmatprep.mubr.bf16.mxu0 0
      %810 = vmatmul.mubr.bf16.gmra.mrb[0].mxu0 %v719
      %v811 = vpop.f32.mrb[0].mxu0
      %v812 = vadd.f32 %v671, %v811
      %v813 = vpop.f32.mrb[0].mxu0
      %v814 = vpop.f32.mrb[0].mxu0
      %v815 = vadd.f32 %v671, %v814
      %v816 = vpop.f32.mrb[0].mxu0
      %817 = vdwg.mxu0
      %v818 = vpack.c.bf16 %v759, %v756
      %v819 = vpack.c.bf16 %v767, %v764
      %v820 = vpack.c.bf16 %v775, %v772
      %v821 = vpack.c.bf16 %v783, %v780
      %v822 = vpack.c.bf16 %v791, %v788
      %v823 = vpack.c.bf16 %v799, %v796
      %v824 = vpack.c.bf16 %v807, %v804
      %v825 = vpack.c.bf16 %v815, %v812
      %v826 = vld [vmem:[#allocation2] sm:$0xff]
      %v827 = vld [vmem:[#allocation2 + $0x8] sm:$0xff]
      %v828 = vld [vmem:[#allocation2 + $0x10] sm:$0xff]
      %v829 = vld [vmem:[#allocation2 + $0x18] sm:$0xff]
      %v830 = vld [vmem:[#allocation2 + $0x20] sm:$0xff]
      %v831 = vld [vmem:[#allocation2 + $0x28] sm:$0xff]
      %v832 = vld [vmem:[#allocation2 + $0x30] sm:$0xff]
      %v833 = vld [vmem:[#allocation2 + $0x38] sm:$0xff]
      %834 = vxpose.xlu0.c.b16.start [1/8] %v650, 128
      %835 = vxpose.xlu0.c.b16.cont [2/8] %v651, 128
      %836 = vxpose.xlu0.c.b16.cont [3/8] %v652, 128
      %837 = vxpose.xlu0.c.b16.cont [4/8] %v653, 128
      %838 = vxpose.xlu0.c.b16.cont [5/8] %v654, 128
      %839 = vxpose.xlu0.c.b16.cont [6/8] %v655, 128
      %840 = vxpose.xlu0.c.b16.cont [7/8] %v656, 128
      %841 = vxpose.xlu0.c.b16.end [8/8] %v657, 128
      %v842 = vpop.trf.xlu0
      %v843 = vpop.trf.xlu0
      %v844 = vpop.trf.xlu0
      %v845 = vpop.trf.xlu0
      %v846 = vpop.trf.xlu0
      %v847 = vpop.trf.xlu0
      %v848 = vpop.trf.xlu0
      %v849 = vpop.trf.xlu0
      %850 = vmatprep.subr.bf16.mxu0 0
      %851 = vmatpush1.bf16.msra.mxu0 %v818
      %852 = vmatprep.subr.bf16.mxu0 0
      %853 = vmatpush1.bf16.msra.mxu0 %v819
      %854 = vmatprep.subr.bf16.mxu0 0
      %855 = vmatpush1.bf16.msra.mxu0 %v820
      %856 = vmatprep.subr.bf16.mxu0 0
      %857 = vmatpush1.bf16.msra.mxu0 %v821
      %858 = vmatprep.subr.bf16.mxu0 0
      %859 = vmatpush1.bf16.msra.mxu0 %v822
      %860 = vmatprep.subr.bf16.mxu0 0
      %861 = vmatpush1.bf16.msra.mxu0 %v823
      %862 = vmatprep.subr.bf16.mxu0 0
      %863 = vmatpush1.bf16.msra.mxu0 %v824
      %864 = vmatprep.subr.bf16.mxu0 0
      %865 = vmatpush1.bf16.msra.mxu0 %v825
      %866 = vmatprep.subr.bf16.mxu0 0
      %867 = vmatpush1.bf16.msra.mxu0 0
      %868 = vmatprep.subr.bf16.mxu0 0
      %869 = vmatpush1.bf16.msra.mxu0 0
      %870 = vmatprep.subr.bf16.mxu0 0
      %871 = vmatpush1.bf16.msra.mxu0 0
      %872 = vmatprep.subr.bf16.mxu0 0
      %873 = vmatpush1.bf16.msra.mxu0 0
      %874 = vmatprep.subr.bf16.mxu0 0
      %875 = vmatpush1.bf16.msra.mxu0 0
      %876 = vmatprep.subr.bf16.mxu0 0
      %877 = vmatpush1.bf16.msra.mxu0 0
      %878 = vmatprep.subr.bf16.mxu0 0
      %879 = vmatpush1.bf16.msra.mxu0 0
      %880 = vmatprep.subr.bf16.mxu0 0
      %881 = vmatpush1.bf16.msra.mxu0 0
      %882 = vmatprep.mubr.bf16.mxu0 0
      %883 = vmatmul.mubr.bf16.gmra.mrb[0].mxu0 %v842
      %v884 = vpop.f32.mrb[0].mxu0
      %v885 = vadd.f32 0.0, %v884
      %v886 = vpop.f32.mrb[0].mxu0
      %v887 = vpop.f32.mrb[0].mxu0
      %v888 = vadd.f32 0.0, %v887
      %v889 = vpop.f32.mrb[0].mxu0
      %890 = vmatprep.mubr.bf16.mxu0 0
      %891 = vmatmul.mubr.bf16.gmra.mrb[0].mxu0 %v843
      %v892 = vpop.f32.mrb[0].mxu0
      %v893 = vadd.f32 0.0, %v892
      %v894 = vpop.f32.mrb[0].mxu0
      %v895 = vpop.f32.mrb[0].mxu0
      %v896 = vadd.f32 0.0, %v895
      %v897 = vpop.f32.mrb[0].mxu0
      %898 = vmatprep.mubr.bf16.mxu0 0
      %899 = vmatmul.mubr.bf16.gmra.mrb[0].mxu0 %v844
      %v900 = vpop.f32.mrb[0].mxu0
      %v901 = vadd.f32 0.0, %v900
      %v902 = vpop.f32.mrb[0].mxu0
      %v903 = vpop.f32.mrb[0].mxu0
      %v904 = vadd.f32 0.0, %v903
      %v905 = vpop.f32.mrb[0].mxu0
      %906 = vmatprep.mubr.bf16.mxu0 0
      %907 = vmatmul.mubr.bf16.gmra.mrb[0].mxu0 %v845
      %v908 = vpop.f32.mrb[0].mxu0
      %v909 = vadd.f32 0.0, %v908
      %v910 = vpop.f32.mrb[0].mxu0
      %v911 = vpop.f32.mrb[0].mxu0
      %v912 = vadd.f32 0.0, %v911
      %v913 = vpop.f32.mrb[0].mxu0
      %914 = vdwg.mxu0
      %v915 = vadd.f32 %v826, %v885
      %v916 = vadd.f32 %v827, %v888
      %v917 = vadd.f32 %v828, %v893
      %v918 = vadd.f32 %v829, %v896
      %v919 = vadd.f32 %v830, %v901
      %v920 = vadd.f32 %v831, %v904
      %v921 = vadd.f32 %v832, %v909
      %v922 = vadd.f32 %v833, %v912
      %923 = vst [vmem:[#allocation2] sm:$0xff] %v915
      %924 = vst [vmem:[#allocation2 + $0x8] sm:$0xff] %v916
      %925 = vst [vmem:[#allocation2 + $0x10] sm:$0xff] %v917
      %926 = vst [vmem:[#allocation2 + $0x18] sm:$0xff] %v918
      %927 = vst [vmem:[#allocation2 + $0x20] sm:$0xff] %v919
      %928 = vst [vmem:[#allocation2 + $0x28] sm:$0xff] %v920
      %929 = vst [vmem:[#allocation2 + $0x30] sm:$0xff] %v921
      %930 = vst [vmem:[#allocation2 + $0x38] sm:$0xff] %v922
      %p931 = scmp.eq.s32.totalorder %s22, 1
      // Predicated region
      $region49: #{cga_forward.2} parent=43 // pred_check
        %p932 = pneg %p931
      $region50: #{cga_forward.2} parent=43 // pred_check_branch
        %934 = sbr.rel (%p932) target = $region52
      $region51: #{cga_forward.2} parent=43 // pred_region
        %v935 = vld [vmem:[#allocation2] sm:$0xff]
        %v936 = vld [vmem:[#allocation2 + $0x8] sm:$0xff]
        %v937 = vld [vmem:[#allocation2 + $0x10] sm:$0xff]
        %v938 = vld [vmem:[#allocation2 + $0x18] sm:$0xff]
        %v939 = vld [vmem:[#allocation2 + $0x20] sm:$0xff]
        %v940 = vld [vmem:[#allocation2 + $0x28] sm:$0xff]
        %v941 = vld [vmem:[#allocation2 + $0x30] sm:$0xff]
        %v942 = vld [vmem:[#allocation2 + $0x38] sm:$0xff]
        %943 = vst [vmem:[%s315] sm:$0xff] %v935
        %944 = vst [vmem:[%s315 + $0x8] sm:$0xff] %v936
        %945 = vst [vmem:[%s315 + $0x10] sm:$0xff] %v937
        %946 = vst [vmem:[%s315 + $0x18] sm:$0xff] %v938
        %947 = vst [vmem:[%s315 + $0x20] sm:$0xff] %v939
        %948 = vst [vmem:[%s315 + $0x28] sm:$0xff] %v940
        %949 = vst [vmem:[%s315 + $0x30] sm:$0xff] %v941
        %950 = vst [vmem:[%s315 + $0x38] sm:$0xff] %v942
      $region52: #{cga_forward.2} parent=43 // pred_fallthru
        _
      %p951 = scmp.lt.s32.totalorder %s21, 1
      %s952 = scalar_select %p951, %s21, 1
      %s953 = smul.addr %s952, 8
      %s954 = smul.addr %s953, 8
      %s955 = scalar_lea.vmem %s6, %s954
      // Predicated region
      $region53: #{cga_forward.2} parent=43 // pred_check
        %p956 = pneg %p187
      $region54: #{cga_forward.2} parent=43 // pred_check_branch
        %958 = sbr.rel (%p956) target = $region56
      $region55: #{cga_forward.2} parent=43 // pred_region
        _
      $region56: #{cga_forward.2} parent=43 // pred_fallthru
        _
    $region44: #{cga_forward.2} parent=5 // pred_fallthru
      _
    %p959 = scmp.le.s32.totalorder 2, %s12
    // Predicated region
    $region57: #{cga_forward.2} parent=5 // pred_check
      %p960 = pneg %p959
    $region58: #{cga_forward.2} parent=5 // pred_check_branch
      %962 = sbr.rel (%p960) target = $region60
    $region59: #{cga_forward.2} parent=5 // pred_region
      %s963 = ssub.s32 %s12, 2
      // Predicated region
      $region61: #{cga_forward.2} parent=59 // pred_check
        %p964 = pneg %p193
      $region62: #{cga_forward.2} parent=59 // pred_check_branch
        %966 = sbr.rel (%p964) target = $region64
      $region63: #{cga_forward.2} parent=59 // pred_region
        %p967 = scmp.lt.s32.totalorder %s23, 1
        %s968 = scalar_select %p967, %s23, 1
        %s969 = smul.addr %s968, 8
        %s970 = smul.addr %s969, 8
        %s971 = scalar_lea.vmem %s6, %s970
      $region64: #{cga_forward.2} parent=59 // pred_fallthru
        _
    $region60: #{cga_forward.2} parent=5 // pred_fallthru
      _
  $region6: #{cga_forward.2} parent=0 // loop_footer
    %s16 = sadd.s32 1, %s12
  $region7: #{cga_forward.2} parent=0 // loop_footer_branch
    %11 = sbr.rel target = $region3
  $region8: #{cga_forward.2} parent=0 // loop_exit
    _

// kernel: cga_forward.3
$region0: #{cga_forward.3}
  #allocation0 [shape = 'u32[]', space=smem, size = 0x4, offset = 0x4, fixed_abs, tag = 'smem constant byte address 0x4 - core index']
  #allocation1 [shape = 'u32[144,128]{1,0:T(1,128)}', space=vmem, size = 0x12000, scoped, tag = 'internal scratch']
  #allocation2 [shape = 'f32[1]{0:T(128)S(6)}', space=smem, size = 0x200, scoped, tag = 'scoped memory for cga_forward.3']
  %s0 = inlined_call_operand.<no memory space> [shape: f32[1], index: 0, kind: input, shape index: {}]
  %s1 = inlined_call_operand.vmem [shape: bf16[2,128,128], index: 1, kind: input, shape index: {}]
  %s2 = inlined_call_operand.vmem [shape: f32[2,128,128], index: 2, kind: input, shape index: {}]
  %s3 = inlined_call_operand.vmem [shape: bf16[2,128,128], index: 3, kind: input, shape index: {}]
  %s4 = inlined_call_operand.vmem [shape: bf16[2,128,128], index: 4, kind: input, shape index: {}]
  %s5 = inlined_call_operand.vmem [shape: bf16[128,128], index: 5, kind: input, shape index: {}]
  %s6 = inlined_call_operand.vmem [shape: f32[1,128], index: 6, kind: input, shape index: {}]
  %s7 = inlined_call_operand.vmem [shape: f32[1,128], index: 7, kind: input, shape index: {}]
  %s8 = inlined_call_operand.vmem [shape: f32[2,128,128], index: 8, kind: output, shape index: {}]
  %s9 = sld [smem:[#allocation0]]
  $region65: #{cga_forward.3} parent=0
    _
  %s11 = ssub.s32 1, %s9
  %s12 = scalar_select 0, %s11, %s9
  %13 = sst [smem:[#allocation2]] %s0
  loop: start=0, step=1, limit=6
  $region2: #{cga_forward.3} parent=0 // loop_pre_header
    _
  $region3: #{cga_forward.3} parent=0 // loop_header
    %s15 = sphi 0, %s19
    %p16 = scmp.ge.s32.totalorder %s15, 6
    %s22 = sphi 0, %s34
    %s23 = sphi 0, %s30
    %s24 = sphi 0, %s22
    %s25 = sphi 0, %s23
    %s26 = sphi 0, %s24
    %s27 = sphi 0, %s25
    %s35 = sphi 0, %s35
    %s37 = sphi 0, %s35
    %s38 = sphi 0, %s37
    %s52 = sphi 0, %s38
    %s60 = sphi 0, %s62
    %s63 = sphi 0, %s60
    %s64 = sphi 0, %s63
    %s80 = sphi 0, %s64
    %s88 = sphi 0, %s90
    %s91 = sphi 0, %s88
    %s92 = sphi 0, %s91
    %s108 = sphi 0, %s92
    %s114 = sphi 0, %s116
    %s117 = sphi 0, %s114
    %s118 = sphi 0, %s117
    %s134 = sphi 0, %s118
    %s140 = sphi 0, %s142
    %s143 = sphi 0, %s140
    %s144 = sphi 0, %s143
    %s160 = sphi 0, %s144
    %s164 = sphi 0, %s164
    %s166 = sphi 0, %s164
    %s167 = sphi 0, %s166
    %s181 = sphi 0, %s167
    %s185 = sphi 0, %s185
    %s187 = sphi 0, %s185
    %s188 = sphi 0, %s187
    %s202 = sphi 0, %s188
    %s206 = sphi 0, %s206
    %s208 = sphi 0, %s206
    %s209 = sphi 0, %s208
    %s223 = sphi 0, %s209
    %s231 = sphi 0, %s233
    %s234 = sphi 0, %s231
    %s235 = sphi 0, %s234
    %s251 = sphi 0, %s235
  $region4: #{cga_forward.3} parent=0 // loop_header_branch
    %18 = sbr.rel (%p16) target = $region8
  $region5: #{cga_forward.3} parent=0 // loop_body
    %s20 = ssub.s32 %s15, 1
    %s21 = ssub.s32 %s15, 2
    %s28 = sadd.s32 1, %s23
    %p29 = scmp.ge.s32.totalorder %s28, 2
    %s30 = scalar_select %p29, 0, %s28
    %s31 = sadd.s32 1, %s22
    %s32 = scalar_select %p29, %s31, %s22
    %p33 = scmp.ge.s32.totalorder %s32, 2
    %s34 = scalar_select %p33, 0, %s32
    %s36 = sadd.s32 %s35, 1
    %p39 = scmp.eq.s32.totalorder %s15, 3
    %p40 = scmp.ne.s32.totalorder %s35, %s37
    %p41 = scmp.eq.s32.totalorder %s15, 0
    %p42 = por %p40, %p41
    %p43 = scmp.ne.s32.totalorder %s35, %s37
    %p44 = scmp.eq.s32.totalorder %s20, 3
    %p45 = por %p43, %p44
    %p46 = scmp.ne.s32.totalorder %s37, %s38
    %p47 = scmp.eq.s32.totalorder %s20, 0
    %p48 = por %p46, %p47
    %p49 = scmp.ne.s32.totalorder %s37, %s38
    %p50 = scmp.eq.s32.totalorder %s21, 3
    %p51 = por %p49, %p50
    %p53 = scmp.ne.s32.totalorder %s38, %s52
    %p54 = scmp.eq.s32.totalorder %s21, 0
    %p55 = por %p53, %p54
    %s56 = ssub.s32 %s22, %s34
    %s57 = ssub.s32 %s23, %s30
    %s58 = sor.u32 %s56, %s57
    %p59 = scmp.eq.s32.totalorder %s58, 0
    %s61 = sadd.s32 %s60, 1
    %s62 = scalar_select %p59, %s60, %s61
    %p65 = pneg %p59
    %p66 = scmp.eq.s32.totalorder %s15, 3
    %p67 = por %p65, %p66
    %p68 = scmp.ne.s32.totalorder %s60, %s63
    %p69 = scmp.eq.s32.totalorder %s15, 0
    %p70 = por %p68, %p69
    %p71 = scmp.ne.s32.totalorder %s60, %s63
    %p72 = scmp.eq.s32.totalorder %s20, 3
    %p73 = por %p71, %p72
    %p74 = scmp.ne.s32.totalorder %s63, %s64
    %p75 = scmp.eq.s32.totalorder %s20, 0
    %p76 = por %p74, %p75
    %p77 = scmp.ne.s32.totalorder %s63, %s64
    %p78 = scmp.eq.s32.totalorder %s21, 3
    %p79 = por %p77, %p78
    %p81 = scmp.ne.s32.totalorder %s64, %s80
    %p82 = scmp.eq.s32.totalorder %s21, 0
    %p83 = por %p81, %p82
    %s84 = ssub.s32 %s22, %s34
    %s85 = ssub.s32 %s23, %s30
    %s86 = sor.u32 %s84, %s85
    %p87 = scmp.eq.s32.totalorder %s86, 0
    %s89 = sadd.s32 %s88, 1
    %s90 = scalar_select %p87, %s88, %s89
    %p93 = pneg %p87
    %p94 = scmp.eq.s32.totalorder %s15, 3
    %p95 = por %p93, %p94
    %p96 = scmp.ne.s32.totalorder %s88, %s91
    %p97 = scmp.eq.s32.totalorder %s15, 0
    %p98 = por %p96, %p97
    %p99 = scmp.ne.s32.totalorder %s88, %s91
    %p100 = scmp.eq.s32.totalorder %s20, 3
    %p101 = por %p99, %p100
    %p102 = scmp.ne.s32.totalorder %s91, %s92
    %p103 = scmp.eq.s32.totalorder %s20, 0
    %p104 = por %p102, %p103
    %p105 = scmp.ne.s32.totalorder %s91, %s92
    %p106 = scmp.eq.s32.totalorder %s21, 3
    %p107 = por %p105, %p106
    %p109 = scmp.ne.s32.totalorder %s92, %s108
    %p110 = scmp.eq.s32.totalorder %s21, 0
    %p111 = por %p109, %p110
    %s112 = ssub.s32 %s22, %s34
    %p113 = scmp.eq.s32.totalorder %s112, 0
    %s115 = sadd.s32 %s114, 1
    %s116 = scalar_select %p113, %s114, %s115
    %p119 = pneg %p113
    %p120 = scmp.eq.s32.totalorder %s15, 3
    %p121 = por %p119, %p120
    %p122 = scmp.ne.s32.totalorder %s114, %s117
    %p123 = scmp.eq.s32.totalorder %s15, 0
    %p124 = por %p122, %p123
    %p125 = scmp.ne.s32.totalorder %s114, %s117
    %p126 = scmp.eq.s32.totalorder %s20, 3
    %p127 = por %p125, %p126
    %p128 = scmp.ne.s32.totalorder %s117, %s118
    %p129 = scmp.eq.s32.totalorder %s20, 0
    %p130 = por %p128, %p129
    %p131 = scmp.ne.s32.totalorder %s117, %s118
    %p132 = scmp.eq.s32.totalorder %s21, 3
    %p133 = por %p131, %p132
    %p135 = scmp.ne.s32.totalorder %s118, %s134
    %p136 = scmp.eq.s32.totalorder %s21, 0
    %p137 = por %p135, %p136
    %s138 = ssub.s32 %s22, %s34
    %p139 = scmp.eq.s32.totalorder %s138, 0
    %s141 = sadd.s32 %s140, 1
    %s142 = scalar_select %p139, %s140, %s141
    %p145 = pneg %p139
    %p146 = scmp.eq.s32.totalorder %s15, 3
    %p147 = por %p145, %p146
    %p148 = scmp.ne.s32.totalorder %s140, %s143
    %p149 = scmp.eq.s32.totalorder %s15, 0
    %p150 = por %p148, %p149
    %p151 = scmp.ne.s32.totalorder %s140, %s143
    %p152 = scmp.eq.s32.totalorder %s20, 3
    %p153 = por %p151, %p152
    %p154 = scmp.ne.s32.totalorder %s143, %s144
    %p155 = scmp.eq.s32.totalorder %s20, 0
    %p156 = por %p154, %p155
    %p157 = scmp.ne.s32.totalorder %s143, %s144
    %p158 = scmp.eq.s32.totalorder %s21, 3
    %p159 = por %p157, %p158
    %p161 = scmp.ne.s32.totalorder %s144, %s160
    %p162 = scmp.eq.s32.totalorder %s21, 0
    %p163 = por %p161, %p162
    %s165 = sadd.s32 %s164, 1
    %p168 = scmp.eq.s32.totalorder %s15, 3
    %p169 = scmp.ne.s32.totalorder %s164, %s166
    %p170 = scmp.eq.s32.totalorder %s15, 0
    %p171 = por %p169, %p170
    %p172 = scmp.ne.s32.totalorder %s164, %s166
    %p173 = scmp.eq.s32.totalorder %s20, 3
    %p174 = por %p172, %p173
    %p175 = scmp.ne.s32.totalorder %s166, %s167
    %p176 = scmp.eq.s32.totalorder %s20, 0
    %p177 = por %p175, %p176
    %p178 = scmp.ne.s32.totalorder %s166, %s167
    %p179 = scmp.eq.s32.totalorder %s21, 3
    %p180 = por %p178, %p179
    %p182 = scmp.ne.s32.totalorder %s167, %s181
    %p183 = scmp.eq.s32.totalorder %s21, 0
    %p184 = por %p182, %p183
    %s186 = sadd.s32 %s185, 1
    %p189 = scmp.eq.s32.totalorder %s15, 3
    %p190 = scmp.ne.s32.totalorder %s185, %s187
    %p191 = scmp.eq.s32.totalorder %s15, 0
    %p192 = por %p190, %p191
    %p193 = scmp.ne.s32.totalorder %s185, %s187
    %p194 = scmp.eq.s32.totalorder %s20, 3
    %p195 = por %p193, %p194
    %p196 = scmp.ne.s32.totalorder %s187, %s188
    %p197 = scmp.eq.s32.totalorder %s20, 0
    %p198 = por %p196, %p197
    %p199 = scmp.ne.s32.totalorder %s187, %s188
    %p200 = scmp.eq.s32.totalorder %s21, 3
    %p201 = por %p199, %p200
    %p203 = scmp.ne.s32.totalorder %s188, %s202
    %p204 = scmp.eq.s32.totalorder %s21, 0
    %p205 = por %p203, %p204
    %s207 = sadd.s32 %s206, 1
    %p210 = scmp.eq.s32.totalorder %s15, 3
    %p211 = scmp.ne.s32.totalorder %s206, %s208
    %p212 = scmp.eq.s32.totalorder %s15, 0
    %p213 = por %p211, %p212
    %p214 = scmp.ne.s32.totalorder %s206, %s208
    %p215 = scmp.eq.s32.totalorder %s20, 3
    %p216 = por %p214, %p215
    %p217 = scmp.ne.s32.totalorder %s208, %s209
    %p218 = scmp.eq.s32.totalorder %s20, 0
    %p219 = por %p217, %p218
    %p220 = scmp.ne.s32.totalorder %s208, %s209
    %p221 = scmp.eq.s32.totalorder %s21, 3
    %p222 = por %p220, %p221
    %p224 = scmp.ne.s32.totalorder %s209, %s223
    %p225 = scmp.eq.s32.totalorder %s21, 0
    %p226 = por %p224, %p225
    %s227 = ssub.s32 %s22, %s34
    %s228 = ssub.s32 %s23, %s30
    %s229 = sor.u32 %s227, %s228
    %p230 = scmp.eq.s32.totalorder %s229, 0
    %s232 = sadd.s32 %s231, 1
    %s233 = scalar_select %p230, %s231, %s232
    %p236 = pneg %p230
    %p237 = scmp.eq.s32.totalorder %s15, 3
    %p238 = por %p236, %p237
    %p239 = scmp.ne.s32.totalorder %s231, %s234
    %p240 = scmp.eq.s32.totalorder %s15, 0
    %p241 = por %p239, %p240
    %p242 = scmp.ne.s32.totalorder %s231, %s234
    %p243 = scmp.eq.s32.totalorder %s20, 3
    %p244 = por %p242, %p243
    %p245 = scmp.ne.s32.totalorder %s234, %s235
    %p246 = scmp.eq.s32.totalorder %s20, 0
    %p247 = por %p245, %p246
    %p248 = scmp.ne.s32.totalorder %s234, %s235
    %p249 = scmp.eq.s32.totalorder %s21, 3
    %p250 = por %p248, %p249
    %p252 = scmp.ne.s32.totalorder %s235, %s251
    %p253 = scmp.eq.s32.totalorder %s21, 0
    %p254 = por %p252, %p253
    %p255 = scmp.le.s32.totalorder 1, %s15
    %p256 = scmp.lt.s32.totalorder %s15, 5
    %p257 = pnand %p255, %p256
    %p258 = pneg %p257
    // Predicated region
    $region9: #{cga_forward.3} parent=5 // pred_check
      _
    $region10: #{cga_forward.3} parent=5 // pred_check_branch
      %260 = sbr.rel (%p257) target = $region12
    $region11: #{cga_forward.3} parent=5 // pred_region
      %s261 = ssub.s32 %s15, 1
      // Predicated region
      $region13: #{cga_forward.3} parent=11 // pred_check
        %p262 = pneg %p48
      $region14: #{cga_forward.3} parent=11 // pred_check_branch
        %264 = sbr.rel (%p262) target = $region16
      $region15: #{cga_forward.3} parent=11 // pred_region
        _
      $region16: #{cga_forward.3} parent=11 // pred_fallthru
        _
      // Predicated region
      $region17: #{cga_forward.3} parent=11 // pred_check
        %p265 = pneg %p177
      $region18: #{cga_forward.3} parent=11 // pred_check_branch
        %267 = sbr.rel (%p265) target = $region20
      $region19: #{cga_forward.3} parent=11 // pred_region
        _
      $region20: #{cga_forward.3} parent=11 // pred_fallthru
        _
      // Predicated region
      $region21: #{cga_forward.3} parent=11 // pred_check
        %p268 = pneg %p198
      $region22: #{cga_forward.3} parent=11 // pred_check_branch
        %270 = sbr.rel (%p268) target = $region24
      $region23: #{cga_forward.3} parent=11 // pred_region
        _
      $region24: #{cga_forward.3} parent=11 // pred_fallthru
        _
      // Predicated region
      $region25: #{cga_forward.3} parent=11 // pred_check
        %p271 = pneg %p219
      $region26: #{cga_forward.3} parent=11 // pred_check_branch
        %273 = sbr.rel (%p271) target = $region28
      $region27: #{cga_forward.3} parent=11 // pred_region
        _
      $region28: #{cga_forward.3} parent=11 // pred_fallthru
        _
    $region12: #{cga_forward.3} parent=5 // pred_fallthru
      _
    %p274 = scmp.lt.s32.totalorder %s15, 4
    // Predicated region
    $region29: #{cga_forward.3} parent=5 // pred_check
      %p275 = pneg %p274
    $region30: #{cga_forward.3} parent=5 // pred_check_branch
      %277 = sbr.rel (%p275) target = $region32
    $region31: #{cga_forward.3} parent=5 // pred_region
      // Predicated region
      $region33: #{cga_forward.3} parent=31 // pred_check
        %p278 = pneg %p70
      $region34: #{cga_forward.3} parent=31 // pred_check_branch
        %280 = sbr.rel (%p278) target = $region36
      $region35: #{cga_forward.3} parent=31 // pred_region
        %s281 = smul.u32 8, %s23
        %p282 = scmp.lt.s32.totalorder %s22, 1
        %s283 = scalar_select %p282, %s22, 1
        %p284 = scmp.lt.s32.totalorder %s281, 15
        %s285 = scalar_select %p284, %s281, 15
        %s286 = smul.addr %s283, 16
        %s287 = sadd.s32 %s285, %s286
        %s288 = smul.addr %s287, 4
        %s289 = scalar_lea.vmem %s1, %s288
        %s290 = smul.u32 8, %s23
      $region36: #{cga_forward.3} parent=31 // pred_fallthru
        _
      // Predicated region
      $region37: #{cga_forward.3} parent=31 // pred_check
        %p291 = pneg %p98
      $region38: #{cga_forward.3} parent=31 // pred_check_branch
        %293 = sbr.rel (%p291) target = $region40
      $region39: #{cga_forward.3} parent=31 // pred_region
        %s294 = smul.u32 8, %s23
        %p295 = scmp.lt.s32.totalorder %s22, 1
        %s296 = scalar_select %p295, %s22, 1
        %p297 = scmp.lt.s32.totalorder %s294, 15
        %s298 = scalar_select %p297, %s294, 15
        %s299 = smul.addr %s296, 16
        %s300 = sadd.s32 %s298, %s299
        %s301 = smul.addr %s300, 8
        %s302 = scalar_lea.vmem %s2, %s301
        %s303 = smul.u32 8, %s23
      $region40: #{cga_forward.3} parent=31 // pred_fallthru
        _
      // Predicated region
      $region41: #{cga_forward.3} parent=31 // pred_check
        %p304 = pneg %p124
      $region42: #{cga_forward.3} parent=31 // pred_check_branch
        %306 = sbr.rel (%p304) target = $region44
      $region43: #{cga_forward.3} parent=31 // pred_region
        %p307 = scmp.lt.s32.totalorder %s22, 1
        %s308 = scalar_select %p307, %s22, 1
        %s309 = smul.addr %s308, 16
        %s310 = smul.addr %s309, 4
        %s311 = scalar_lea.vmem %s3, %s310
      $region44: #{cga_forward.3} parent=31 // pred_fallthru
        _
      // Predicated region
      $region45: #{cga_forward.3} parent=31 // pred_check
        %p312 = pneg %p150
      $region46: #{cga_forward.3} parent=31 // pred_check_branch
        %314 = sbr.rel (%p312) target = $region48
      $region47: #{cga_forward.3} parent=31 // pred_region
        %p315 = scmp.lt.s32.totalorder %s22, 1
        %s316 = scalar_select %p315, %s22, 1
        %s317 = smul.addr %s316, 16
        %s318 = smul.addr %s317, 4
        %s319 = scalar_lea.vmem %s4, %s318
      $region48: #{cga_forward.3} parent=31 // pred_fallthru
        _
    $region32: #{cga_forward.3} parent=5 // pred_fallthru
      _
    %p320 = scmp.le.s32.totalorder 1, %s15
    %p321 = scmp.lt.s32.totalorder %s15, 5
    %p322 = pnand %p320, %p321
    %p323 = pneg %p322
    // Predicated region
    $region49: #{cga_forward.3} parent=5 // pred_check
      _
    $region50: #{cga_forward.3} parent=5 // pred_check_branch
      %325 = sbr.rel (%p322) target = $region52
    $region51: #{cga_forward.3} parent=5 // pred_region
      %s326 = ssub.s32 %s15, 1
      %p327 = pneg %p48
      %p328 = pneg %p45
      %s329 = smul.u32 8, %s25
      %p330 = scmp.lt.s32.totalorder %s24, 1
      %s331 = scalar_select %p330, %s24, 1
      %p332 = scmp.lt.s32.totalorder %s329, 15
      %s333 = scalar_select %p332, %s329, 15
      %s334 = smul.addr %s331, 16
      %s335 = sadd.s32 %s333, %s334
      %s336 = smul.addr %s335, 4
      %s337 = scalar_lea.vmem %s1, %s336
      %p338 = pneg %p76
      %p339 = pneg %p73
      %s340 = smul.u32 8, %s25
      %p341 = scmp.lt.s32.totalorder %s24, 1
      %s342 = scalar_select %p341, %s24, 1
      %p343 = scmp.lt.s32.totalorder %s340, 15
      %s344 = scalar_select %p343, %s340, 15
      %s345 = smul.addr %s342, 16
      %s346 = sadd.s32 %s344, %s345
      %s347 = smul.addr %s346, 8
      %s348 = scalar_lea.vmem %s2, %s347
      %p349 = pneg %p104
      %p350 = pneg %p101
      %p351 = scmp.lt.s32.totalorder %s24, 1
      %s352 = scalar_select %p351, %s24, 1
      %s353 = smul.addr %s352, 16
      %s354 = smul.addr %s353, 4
      %s355 = scalar_lea.vmem %s3, %s354
      %p356 = pneg %p130
      %p357 = pneg %p127
      %p358 = scmp.lt.s32.totalorder %s24, 1
      %s359 = scalar_select %p358, %s24, 1
      %s360 = smul.addr %s359, 16
      %s361 = smul.addr %s360, 4
      %s362 = scalar_lea.vmem %s4, %s361
      %p363 = pneg %p156
      %p364 = pneg %p153
      %p365 = pneg %p177
      %p366 = pneg %p174
      %p367 = pneg %p198
      %p368 = pneg %p195
      %p369 = pneg %p219
      %p370 = pneg %p216
      %p371 = pneg %p247
      %p372 = pneg %p244
      %s373 = smul.u32 8, %s25
      %p374 = scmp.lt.s32.totalorder %s24, 1
      %s375 = scalar_select %p374, %s24, 1
      %p376 = scmp.lt.s32.totalorder %s373, 15
      %s377 = scalar_select %p376, %s373, 15
      %s378 = smul.addr %s375, 16
      %s379 = sadd.s32 %s377, %s378
      %s380 = smul.addr %s379, 8
      %s381 = scalar_lea.vmem %s8, %s380
      %s382 = smul.u32 8, %s25
      %p383 = scmp.lt.s32.totalorder %s24, 1
      %s384 = scalar_select %p383, %s24, 1
      %p385 = scmp.lt.s32.totalorder %s382, 15
      %s386 = scalar_select %p385, %s382, 15
      %s387 = smul.addr %s384, 16
      %s388 = sadd.s32 %s386, %s387
      %s389 = smul.addr %s388, 4
      %s390 = scalar_lea.vmem %s1, %s389
      %s391 = smul.u32 8, %s25
      %s392 = smul.u32 8, %s25
      %p393 = scmp.lt.s32.totalorder %s24, 1
      %s394 = scalar_select %p393, %s24, 1
      %p395 = scmp.lt.s32.totalorder %s392, 15
      %s396 = scalar_select %p395, %s392, 15
      %s397 = smul.addr %s394, 16
      %s398 = sadd.s32 %s396, %s397
      %s399 = smul.addr %s398, 8
      %s400 = scalar_lea.vmem %s2, %s399
      %s401 = smul.u32 8, %s25
      %p402 = scmp.lt.s32.totalorder %s24, 1
      %s403 = scalar_select %p402, %s24, 1
      %s404 = smul.addr %s403, 16
      %s405 = smul.addr %s404, 4
      %s406 = scalar_lea.vmem %s3, %s405
      %p407 = scmp.lt.s32.totalorder %s24, 1
      %s408 = scalar_select %p407, %s24, 1
      %s409 = smul.addr %s408, 16
      %s410 = smul.addr %s409, 4
      %s411 = scalar_lea.vmem %s4, %s410
      %s412 = smul.u32 8, %s25
      %p413 = scmp.lt.s32.totalorder %s24, 1
      %s414 = scalar_select %p413, %s24, 1
      %p415 = scmp.lt.s32.totalorder %s412, 15
      %s416 = scalar_select %p415, %s412, 15
      %s417 = smul.addr %s414, 16
      %s418 = sadd.s32 %s416, %s417
      %s419 = smul.addr %s418, 8
      %s420 = scalar_lea.vmem %s8, %s419
      %s421 = smul.u32 8, %s25
      %v423 = vld [vmem:[%s390] sm:$0xf]
      %v424 = vld [vmem:[%s390 + $0x4] sm:$0xf]
      %v425 = vld [vmem:[%s390 + $0x8] sm:$0xf]
      %v426 = vld [vmem:[%s390 + $0xc] sm:$0xf]
      %v427 = vld [vmem:[%s390 + $0x10] sm:$0xf]
      %v428 = vld [vmem:[%s390 + $0x14] sm:$0xf]
      %v429 = vld [vmem:[%s390 + $0x18] sm:$0xf]
      %v430 = vld [vmem:[%s390 + $0x1c] sm:$0xf]
      %v431 = vld [vmem:[%s400] sm:$0xff]
      %v432 = vld [vmem:[%s400 + $0x8] sm:$0xff]
      %v433 = vld [vmem:[%s400 + $0x10] sm:$0xff]
      %v434 = vld [vmem:[%s400 + $0x18] sm:$0xff]
      %v435 = vld [vmem:[%s400 + $0x20] sm:$0xff]
      %v436 = vld [vmem:[%s400 + $0x28] sm:$0xff]
      %v437 = vld [vmem:[%s400 + $0x30] sm:$0xff]
      %v438 = vld [vmem:[%s400 + $0x38] sm:$0xff]
      %v439 = vld [vmem:[%s5] sm:$0xf]
      %v440 = vld [vmem:[%s5 + $0x4] sm:$0xf]
      %v441 = vld [vmem:[%s5 + $0x8] sm:$0xf]
      %v442 = vld [vmem:[%s5 + $0xc] sm:$0xf]
      %v443 = vld [vmem:[%s5 + $0x10] sm:$0xf]
      %v444 = vld [vmem:[%s5 + $0x14] sm:$0xf]
      %v445 = vld [vmem:[%s5 + $0x18] sm:$0xf]
      %v446 = vld [vmem:[%s5 + $0x1c] sm:$0xf]
      %v447 = vld [vmem:[%s5 + $0x20] sm:$0xf]
      %v448 = vld [vmem:[%s5 + $0x24] sm:$0xf]
      %v449 = vld [vmem:[%s5 + $0x28] sm:$0xf]
      %v450 = vld [vmem:[%s5 + $0x2c] sm:$0xf]
      %v451 = vld [vmem:[%s5 + $0x30] sm:$0xf]
      %v452 = vld [vmem:[%s5 + $0x34] sm:$0xf]
      %v453 = vld [vmem:[%s5 + $0x38] sm:$0xf]
      %v454 = vld [vmem:[%s5 + $0x3c] sm:$0xf]
      %v455 = vld [vmem:[%s6] sm:$0x1]
      %v457 = vlaneseq
      %v458 = vshrl.u32 %v457, 7
      %v459 = vsub.s32 0, %v458
      %v460 = vrot.slane %v455, %v459
      %v470 = vunpack.c.l.b16 %v423
      %v471 = vunpack.c.l.b16 %v424
      %v472 = vunpack.c.l.b16 %v425
      %v473 = vunpack.c.l.b16 %v426
      %v474 = vunpack.c.l.b16 %v427
      %v475 = vunpack.c.l.b16 %v428
      %v476 = vunpack.c.l.b16 %v429
      %v477 = vunpack.c.l.b16 %v430
      %v478 = vpack.c.b16 %v471, %v470
      %v479 = vpack.c.b16 %v473, %v472
      %v480 = vpack.c.b16 %v475, %v474
      %v481 = vpack.c.b16 %v477, %v476
      %v502 = vunpack.c.l.b16 %v439
      %v503 = vunpack.c.l.b16 %v440
      %v504 = vunpack.c.l.b16 %v441
      %v505 = vunpack.c.l.b16 %v442
      %v506 = vunpack.c.l.b16 %v443
      %v507 = vunpack.c.l.b16 %v444
      %v508 = vunpack.c.l.b16 %v445
      %v509 = vunpack.c.l.b16 %v446
      %v510 = vunpack.c.l.b16 %v447
      %v511 = vunpack.c.l.b16 %v448
      %v512 = vunpack.c.l.b16 %v449
      %v513 = vunpack.c.l.b16 %v450
      %v514 = vunpack.c.l.b16 %v451
      %v515 = vunpack.c.l.b16 %v452
      %v516 = vunpack.c.l.b16 %v453
      %v517 = vunpack.c.l.b16 %v454
      %v518 = vpack.c.b16 %v503, %v502
      %v519 = vpack.c.b16 %v505, %v504
      %v520 = vpack.c.b16 %v507, %v506
      %v521 = vpack.c.b16 %v509, %v508
      %v522 = vpack.c.b16 %v511, %v510
      %v523 = vpack.c.b16 %v513, %v512
      %v524 = vpack.c.b16 %v515, %v514
      %v525 = vpack.c.b16 %v517, %v516
      %534 = vmatprep.subr.bf16.mxu0 0
      %535 = vmatpush1.bf16.msra.mxu0 %v518
      %536 = vmatprep.subr.bf16.mxu0 0
      %537 = vmatpush1.bf16.msra.mxu0 %v519
      %538 = vmatprep.subr.bf16.mxu0 0
      %539 = vmatpush1.bf16.msra.mxu0 %v520
      %540 = vmatprep.subr.bf16.mxu0 0
      %541 = vmatpush1.bf16.msra.mxu0 %v521
      %542 = vmatprep.subr.bf16.mxu0 0
      %543 = vmatpush1.bf16.msra.mxu0 %v522
      %544 = vmatprep.subr.bf16.mxu0 0
      %545 = vmatpush1.bf16.msra.mxu0 %v523
      %546 = vmatprep.subr.bf16.mxu0 0
      %547 = vmatpush1.bf16.msra.mxu0 %v524
      %548 = vmatprep.subr.bf16.mxu0 0
      %549 = vmatpush1.bf16.msra.mxu0 %v525
      %550 = vmatprep.subr.bf16.mxu0 0
      %551 = vmatpush1.bf16.msra.mxu0 0
      %552 = vmatprep.subr.bf16.mxu0 0
      %553 = vmatpush1.bf16.msra.mxu0 0
      %554 = vmatprep.subr.bf16.mxu0 0
      %555 = vmatpush1.bf16.msra.mxu0 0
      %556 = vmatprep.subr.bf16.mxu0 0
      %557 = vmatpush1.bf16.msra.mxu0 0
      %558 = vmatprep.subr.bf16.mxu0 0
      %559 = vmatpush1.bf16.msra.mxu0 0
      %560 = vmatprep.subr.bf16.mxu0 0
      %561 = vmatpush1.bf16.msra.mxu0 0
      %562 = vmatprep.subr.bf16.mxu0 0
      %563 = vmatpush1.bf16.msra.mxu0 0
      %564 = vmatprep.subr.bf16.mxu0 0
      %565 = vmatpush1.bf16.msra.mxu0 0
      %566 = vmatprep.mubr.bf16.mxu0 0
      %567 = vmatmul.mubr.bf16.gmra.mrb[0].mxu0 %v478
      %v568 = vpop.f32.mrb[0].mxu0
      %v569 = vadd.f32 %v460, %v568
      %v570 = vpop.f32.mrb[0].mxu0
      %v571 = vpop.f32.mrb[0].mxu0
      %v572 = vadd.f32 %v460, %v571
      %v573 = vpop.f32.mrb[0].mxu0
      %574 = vmatprep.mubr.bf16.mxu0 0
      %575 = vmatmul.mubr.bf16.gmra.mrb[0].mxu0 %v479
      %v576 = vpop.f32.mrb[0].mxu0
      %v577 = vadd.f32 %v460, %v576
      %v578 = vpop.f32.mrb[0].mxu0
      %v579 = vpop.f32.mrb[0].mxu0
      %v580 = vadd.f32 %v460, %v579
      %v581 = vpop.f32.mrb[0].mxu0
      %582 = vmatprep.mubr.bf16.mxu0 0
      %583 = vmatmul.mubr.bf16.gmra.mrb[0].mxu0 %v480
      %v584 = vpop.f32.mrb[0].mxu0
      %v585 = vadd.f32 %v460, %v584
      %v586 = vpop.f32.mrb[0].mxu0
      %v587 = vpop.f32.mrb[0].mxu0
      %v588 = vadd.f32 %v460, %v587
      %v589 = vpop.f32.mrb[0].mxu0
      %590 = vmatprep.mubr.bf16.mxu0 0
      %591 = vmatmul.mubr.bf16.gmra.mrb[0].mxu0 %v481
      %v592 = vpop.f32.mrb[0].mxu0
      %v593 = vadd.f32 %v460, %v592
      %v594 = vpop.f32.mrb[0].mxu0
      %v595 = vpop.f32.mrb[0].mxu0
      %v596 = vadd.f32 %v460, %v595
      %v597 = vpop.f32.mrb[0].mxu0
      %598 = vdwg.mxu0
      %vm599 = vcmp.gt.f32.partialorder %v569, 0.0
      %vm600 = vcmp.gt.f32.partialorder %v572, 0.0
      %vm601 = vcmp.gt.f32.partialorder %v577, 0.0
      %vm602 = vcmp.gt.f32.partialorder %v580, 0.0
      %vm603 = vcmp.gt.f32.partialorder %v585, 0.0
      %vm604 = vcmp.gt.f32.partialorder %v588, 0.0
      %vm605 = vcmp.gt.f32.partialorder %v593, 0.0
      %vm606 = vcmp.gt.f32.partialorder %v596, 0.0
      %v607 = vadd.f32 %v569, 1.0
      %v608 = vadd.f32 %v572, 1.0
      %v609 = vadd.f32 %v577, 1.0
      %v610 = vadd.f32 %v580, 1.0
      %v611 = vadd.f32 %v585, 1.0
      %v612 = vadd.f32 %v588, 1.0
      %v613 = vadd.f32 %v593, 1.0
      %v614 = vadd.f32 %v596, 1.0
      %v615 = vmul.f32 %v569, 1.442695
      %v616 = vpow.pop %v615
      %v617 = vmul.f32 %v572, 1.442695
      %v618 = vpow.pop %v617
      %v619 = vmul.f32 %v577, 1.442695
      %v620 = vpow.pop %v619
      %v621 = vmul.f32 %v580, 1.442695
      %v622 = vpow.pop %v621
      %v623 = vmul.f32 %v585, 1.442695
      %v624 = vpow.pop %v623
      %v625 = vmul.f32 %v588, 1.442695
      %v626 = vpow.pop %v625
      %v627 = vmul.f32 %v593, 1.442695
      %v628 = vpow.pop %v627
      %v629 = vmul.f32 %v596, 1.442695
      %v630 = vpow.pop %v629
      %v631 = vsel %vm599, %v607, %v616
      %v632 = vsel %vm600, %v608, %v618
      %v633 = vsel %vm601, %v609, %v620
      %v634 = vsel %vm602, %v610, %v622
      %v635 = vsel %vm603, %v611, %v624
      %v636 = vsel %vm604, %v612, %v626
      %v637 = vsel %vm605, %v613, %v628
      %v638 = vsel %vm606, %v614, %v630
      %v639 = vpack.c.bf16 %v632, %v631
      %v640 = vpack.c.bf16 %v634, %v633
      %v641 = vpack.c.bf16 %v636, %v635
      %v642 = vpack.c.bf16 %v638, %v637
      %v643 = vld [vmem:[%s406] sm:$0xf]
      %v644 = vld [vmem:[%s406 + $0x4] sm:$0xf]
      %v645 = vld [vmem:[%s406 + $0x8] sm:$0xf]
      %v646 = vld [vmem:[%s406 + $0xc] sm:$0xf]
      %v647 = vld [vmem:[%s406 + $0x10] sm:$0xf]
      %v648 = vld [vmem:[%s406 + $0x14] sm:$0xf]
      %v649 = vld [vmem:[%s406 + $0x18] sm:$0xf]
      %v650 = vld [vmem:[%s406 + $0x1c] sm:$0xf]
      %v651 = vld [vmem:[%s406 + $0x20] sm:$0xf]
      %v652 = vld [vmem:[%s406 + $0x24] sm:$0xf]
      %v653 = vld [vmem:[%s406 + $0x28] sm:$0xf]
      %v654 = vld [vmem:[%s406 + $0x2c] sm:$0xf]
      %v655 = vld [vmem:[%s406 + $0x30] sm:$0xf]
      %v656 = vld [vmem:[%s406 + $0x34] sm:$0xf]
      %v657 = vld [vmem:[%s406 + $0x38] sm:$0xf]
      %v658 = vld [vmem:[%s406 + $0x3c] sm:$0xf]
      %v675 = vunpack.c.l.b16 %v643
      %v676 = vunpack.c.l.b16 %v644
      %v677 = vunpack.c.l.b16 %v645
      %v678 = vunpack.c.l.b16 %v646
      %v679 = vunpack.c.l.b16 %v647
      %v680 = vunpack.c.l.b16 %v648
      %v681 = vunpack.c.l.b16 %v649
      %v682 = vunpack.c.l.b16 %v650
      %v683 = vunpack.c.l.b16 %v651
      %v684 = vunpack.c.l.b16 %v652
      %v685 = vunpack.c.l.b16 %v653
      %v686 = vunpack.c.l.b16 %v654
      %v687 = vunpack.c.l.b16 %v655
      %v688 = vunpack.c.l.b16 %v656
      %v689 = vunpack.c.l.b16 %v657
      %v690 = vunpack.c.l.b16 %v658
      %v691 = vpack.c.b16 %v676, %v675
      %v692 = vpack.c.b16 %v678, %v677
      %v693 = vpack.c.b16 %v680, %v679
      %v694 = vpack.c.b16 %v682, %v681
      %v695 = vpack.c.b16 %v684, %v683
      %v696 = vpack.c.b16 %v686, %v685
      %v697 = vpack.c.b16 %v688, %v687
      %v698 = vpack.c.b16 %v690, %v689
      %707 = vmatprep.subr.bf16.mxu0 0
      %708 = vmatpush1.bf16.msra.mxu0 %v691
      %709 = vmatprep.subr.bf16.mxu0 0
      %710 = vmatpush1.bf16.msra.mxu0 %v692
      %711 = vmatprep.subr.bf16.mxu0 0
      %712 = vmatpush1.bf16.msra.mxu0 %v693
      %713 = vmatprep.subr.bf16.mxu0 0
      %714 = vmatpush1.bf16.msra.mxu0 %v694
      %715 = vmatprep.subr.bf16.mxu0 0
      %716 = vmatpush1.bf16.msra.mxu0 %v695
      %717 = vmatprep.subr.bf16.mxu0 0
      %718 = vmatpush1.bf16.msra.mxu0 %v696
      %719 = vmatprep.subr.bf16.mxu0 0
      %720 = vmatpush1.bf16.msra.mxu0 %v697
      %721 = vmatprep.subr.bf16.mxu0 0
      %722 = vmatpush1.bf16.msra.mxu0 %v698
      %723 = vmatprep.subr.bf16.mxu0 0
      %724 = vmatpush1.bf16.msra.mxu0 0
      %725 = vmatprep.subr.bf16.mxu0 0
      %726 = vmatpush1.bf16.msra.mxu0 0
      %727 = vmatprep.subr.bf16.mxu0 0
      %728 = vmatpush1.bf16.msra.mxu0 0
      %729 = vmatprep.subr.bf16.mxu0 0
      %730 = vmatpush1.bf16.msra.mxu0 0
      %731 = vmatprep.subr.bf16.mxu0 0
      %732 = vmatpush1.bf16.msra.mxu0 0
      %733 = vmatprep.subr.bf16.mxu0 0
      %734 = vmatpush1.bf16.msra.mxu0 0
      %735 = vmatprep.subr.bf16.mxu0 0
      %736 = vmatpush1.bf16.msra.mxu0 0
      %737 = vmatprep.subr.bf16.mxu0 0
      %738 = vmatpush1.bf16.msra.mxu0 0
      %739 = vmatprep.mubr.bf16.mxu0 0
      %740 = vmatmul.mubr.bf16.gmra.mrb[0].mxu0 %v639
      %v741 = vpop.f32.mrb[0].mxu0
      %v742 = vadd.f32 0.0, %v741
      %v743 = vpop.f32.mrb[0].mxu0
      %v744 = vpop.f32.mrb[0].mxu0
      %v745 = vadd.f32 0.0, %v744
      %v746 = vpop.f32.mrb[0].mxu0
      %747 = vmatprep.mubr.bf16.mxu0 0
      %748 = vmatmul.mubr.bf16.gmra.mrb[0].mxu0 %v640
      %v749 = vpop.f32.mrb[0].mxu0
      %v750 = vadd.f32 0.0, %v749
      %v751 = vpop.f32.mrb[0].mxu0
      %v752 = vpop.f32.mrb[0].mxu0
      %v753 = vadd.f32 0.0, %v752
      %v754 = vpop.f32.mrb[0].mxu0
      %755 = vmatprep.mubr.bf16.mxu0 0
      %756 = vmatmul.mubr.bf16.gmra.mrb[0].mxu0 %v641
      %v757 = vpop.f32.mrb[0].mxu0
      %v758 = vadd.f32 0.0, %v757
      %v759 = vpop.f32.mrb[0].mxu0
      %v760 = vpop.f32.mrb[0].mxu0
      %v761 = vadd.f32 0.0, %v760
      %v762 = vpop.f32.mrb[0].mxu0
      %763 = vmatprep.mubr.bf16.mxu0 0
      %764 = vmatmul.mubr.bf16.gmra.mrb[0].mxu0 %v642
      %v765 = vpop.f32.mrb[0].mxu0
      %v766 = vadd.f32 0.0, %v765
      %v767 = vpop.f32.mrb[0].mxu0
      %v768 = vpop.f32.mrb[0].mxu0
      %v769 = vadd.f32 0.0, %v768
      %v770 = vpop.f32.mrb[0].mxu0
      %771 = vdwg.mxu0
      %v772 = vld [vmem:[%s411] sm:$0xf]
      %v773 = vld [vmem:[%s411 + $0x4] sm:$0xf]
      %v774 = vld [vmem:[%s411 + $0x8] sm:$0xf]
      %v775 = vld [vmem:[%s411 + $0xc] sm:$0xf]
      %v776 = vld [vmem:[%s411 + $0x10] sm:$0xf]
      %v777 = vld [vmem:[%s411 + $0x14] sm:$0xf]
      %v778 = vld [vmem:[%s411 + $0x18] sm:$0xf]
      %v779 = vld [vmem:[%s411 + $0x1c] sm:$0xf]
      %v780 = vld [vmem:[%s411 + $0x20] sm:$0xf]
      %v781 = vld [vmem:[%s411 + $0x24] sm:$0xf]
      %v782 = vld [vmem:[%s411 + $0x28] sm:$0xf]
      %v783 = vld [vmem:[%s411 + $0x2c] sm:$0xf]
      %v784 = vld [vmem:[%s411 + $0x30] sm:$0xf]
      %v785 = vld [vmem:[%s411 + $0x34] sm:$0xf]
      %v786 = vld [vmem:[%s411 + $0x38] sm:$0xf]
      %v787 = vld [vmem:[%s411 + $0x3c] sm:$0xf]
      %v804 = vunpack.c.l.b16 %v772
      %v805 = vunpack.c.l.b16 %v773
      %v806 = vunpack.c.l.b16 %v774
      %v807 = vunpack.c.l.b16 %v775
      %v808 = vunpack.c.l.b16 %v776
      %v809 = vunpack.c.l.b16 %v777
      %v810 = vunpack.c.l.b16 %v778
      %v811 = vunpack.c.l.b16 %v779
      %v812 = vunpack.c.l.b16 %v780
      %v813 = vunpack.c.l.b16 %v781
      %v814 = vunpack.c.l.b16 %v782
      %v815 = vunpack.c.l.b16 %v783
      %v816 = vunpack.c.l.b16 %v784
      %v817 = vunpack.c.l.b16 %v785
      %v818 = vunpack.c.l.b16 %v786
      %v819 = vunpack.c.l.b16 %v787
      %v820 = vpack.c.b16 %v805, %v804
      %v821 = vpack.c.b16 %v807, %v806
      %v822 = vpack.c.b16 %v809, %v808
      %v823 = vpack.c.b16 %v811, %v810
      %v824 = vpack.c.b16 %v813, %v812
      %v825 = vpack.c.b16 %v815, %v814
      %v826 = vpack.c.b16 %v817, %v816
      %v827 = vpack.c.b16 %v819, %v818
      %836 = vmatprep.subr.bf16.mxu0 0
      %837 = vmatpush1.bf16.msra.mxu0 %v820
      %838 = vmatprep.subr.bf16.mxu0 0
      %839 = vmatpush1.bf16.msra.mxu0 %v821
      %840 = vmatprep.subr.bf16.mxu0 0
      %841 = vmatpush1.bf16.msra.mxu0 %v822
      %842 = vmatprep.subr.bf16.mxu0 0
      %843 = vmatpush1.bf16.msra.mxu0 %v823
      %844 = vmatprep.subr.bf16.mxu0 0
      %845 = vmatpush1.bf16.msra.mxu0 %v824
      %846 = vmatprep.subr.bf16.mxu0 0
      %847 = vmatpush1.bf16.msra.mxu0 %v825
      %848 = vmatprep.subr.bf16.mxu0 0
      %849 = vmatpush1.bf16.msra.mxu0 %v826
      %850 = vmatprep.subr.bf16.mxu0 0
      %851 = vmatpush1.bf16.msra.mxu0 %v827
      %852 = vmatprep.subr.bf16.mxu0 0
      %853 = vmatpush1.bf16.msra.mxu0 0
      %854 = vmatprep.subr.bf16.mxu0 0
      %855 = vmatpush1.bf16.msra.mxu0 0
      %856 = vmatprep.subr.bf16.mxu0 0
      %857 = vmatpush1.bf16.msra.mxu0 0
      %858 = vmatprep.subr.bf16.mxu0 0
      %859 = vmatpush1.bf16.msra.mxu0 0
      %860 = vmatprep.subr.bf16.mxu0 0
      %861 = vmatpush1.bf16.msra.mxu0 0
      %862 = vmatprep.subr.bf16.mxu0 0
      %863 = vmatpush1.bf16.msra.mxu0 0
      %864 = vmatprep.subr.bf16.mxu0 0
      %865 = vmatpush1.bf16.msra.mxu0 0
      %866 = vmatprep.subr.bf16.mxu0 0
      %867 = vmatpush1.bf16.msra.mxu0 0
      %868 = vmatprep.mubr.bf16.mxu0 0
      %869 = vmatmul.mubr.bf16.gmra.mrb[0].mxu0 %v639
      %v870 = vpop.f32.mrb[0].mxu0
      %v871 = vadd.f32 1e-06, %v870
      %v872 = vpop.f32.mrb[0].mxu0
      %v873 = vpop.f32.mrb[0].mxu0
      %v874 = vadd.f32 1e-06, %v873
      %v875 = vpop.f32.mrb[0].mxu0
      %876 = vmatprep.mubr.bf16.mxu0 0
      %877 = vmatmul.mubr.bf16.gmra.mrb[0].mxu0 %v640
      %v878 = vpop.f32.mrb[0].mxu0
      %v879 = vadd.f32 1e-06, %v878
      %v880 = vpop.f32.mrb[0].mxu0
      %v881 = vpop.f32.mrb[0].mxu0
      %v882 = vadd.f32 1e-06, %v881
      %v883 = vpop.f32.mrb[0].mxu0
      %884 = vmatprep.mubr.bf16.mxu0 0
      %885 = vmatmul.mubr.bf16.gmra.mrb[0].mxu0 %v641
      %v886 = vpop.f32.mrb[0].mxu0
      %v887 = vadd.f32 1e-06, %v886
      %v888 = vpop.f32.mrb[0].mxu0
      %v889 = vpop.f32.mrb[0].mxu0
      %v890 = vadd.f32 1e-06, %v889
      %v891 = vpop.f32.mrb[0].mxu0
      %892 = vmatprep.mubr.bf16.mxu0 0
      %893 = vmatmul.mubr.bf16.gmra.mrb[0].mxu0 %v642
      %v894 = vpop.f32.mrb[0].mxu0
      %v895 = vadd.f32 1e-06, %v894
      %v896 = vpop.f32.mrb[0].mxu0
      %v897 = vpop.f32.mrb[0].mxu0
      %v898 = vadd.f32 1e-06, %v897
      %v899 = vpop.f32.mrb[0].mxu0
      %900 = vdwg.mxu0
      %v901 = vrcp.pop %v871
      %v902 = vrcp.pop %v874
      %v903 = vrcp.pop %v879
      %v904 = vrcp.pop %v882
      %v905 = vrcp.pop %v887
      %v906 = vrcp.pop %v890
      %v907 = vrcp.pop %v895
      %v908 = vrcp.pop %v898
      %v909 = vmul.f32 %v742, %v901
      %v910 = vmul.f32 %v745, %v902
      %v911 = vmul.f32 %v750, %v903
      %v912 = vmul.f32 %v753, %v904
      %v913 = vmul.f32 %v758, %v905
      %v914 = vmul.f32 %v761, %v906
      %v915 = vmul.f32 %v766, %v907
      %v916 = vmul.f32 %v769, %v908
      %v917 = vld [vmem:[%s7] sm:$0x1]
      %v919 = vlaneseq
      %v920 = vshrl.u32 %v919, 7
      %v921 = vsub.s32 0, %v920
      %v922 = vrot.slane %v917, %v921
      %v924 = vadd.f32 %v909, %v922
      %v925 = vadd.f32 %v910, %v922
      %v926 = vadd.f32 %v911, %v922
      %v927 = vadd.f32 %v912, %v922
      %v928 = vadd.f32 %v913, %v922
      %v929 = vadd.f32 %v914, %v922
      %v930 = vadd.f32 %v915, %v922
      %v931 = vadd.f32 %v916, %v922
      %s932 = sld [smem:[#allocation2]]
      %v933 = vstv %s932
      %v934 = vmul.f32 %v933, %v924
      %v935 = vmul.f32 %v933, %v925
      %v936 = vmul.f32 %v933, %v926
      %v937 = vmul.f32 %v933, %v927
      %v938 = vmul.f32 %v933, %v928
      %v939 = vmul.f32 %v933, %v929
      %v940 = vmul.f32 %v933, %v930
      %v941 = vmul.f32 %v933, %v931
      %v942 = vadd.f32 %v431, %v934
      %v943 = vadd.f32 %v432, %v935
      %v944 = vadd.f32 %v433, %v936
      %v945 = vadd.f32 %v434, %v937
      %v946 = vadd.f32 %v435, %v938
      %v947 = vadd.f32 %v436, %v939
      %v948 = vadd.f32 %v437, %v940
      %v949 = vadd.f32 %v438, %v941
      %950 = vst [vmem:[%s420] sm:$0xff] %v942
      %951 = vst [vmem:[%s420 + $0x8] sm:$0xff] %v943
      %952 = vst [vmem:[%s420 + $0x10] sm:$0xff] %v944
      %953 = vst [vmem:[%s420 + $0x18] sm:$0xff] %v945
      %954 = vst [vmem:[%s420 + $0x20] sm:$0xff] %v946
      %955 = vst [vmem:[%s420 + $0x28] sm:$0xff] %v947
      %956 = vst [vmem:[%s420 + $0x30] sm:$0xff] %v948
      %957 = vst [vmem:[%s420 + $0x38] sm:$0xff] %v949
      %s958 = smul.u32 8, %s25
      %p959 = scmp.lt.s32.totalorder %s24, 1
      %s960 = scalar_select %p959, %s24, 1
      %p961 = scmp.lt.s32.totalorder %s958, 15
      %s962 = scalar_select %p961, %s958, 15
      %s963 = smul.addr %s960, 16
      %s964 = sadd.s32 %s962, %s963
      %s965 = smul.addr %s964, 8
      %s966 = scalar_lea.vmem %s8, %s965
      // Predicated region
      $region53: #{cga_forward.3} parent=51 // pred_check
        %p967 = pneg %p244
      $region54: #{cga_forward.3} parent=51 // pred_check_branch
        %969 = sbr.rel (%p967) target = $region56
      $region55: #{cga_forward.3} parent=51 // pred_region
        %s970 = smul.u32 8, %s25
      $region56: #{cga_forward.3} parent=51 // pred_fallthru
        _
    $region52: #{cga_forward.3} parent=5 // pred_fallthru
      _
    %p971 = scmp.le.s32.totalorder 2, %s15
    // Predicated region
    $region57: #{cga_forward.3} parent=5 // pred_check
      %p972 = pneg %p971
    $region58: #{cga_forward.3} parent=5 // pred_check_branch
      %974 = sbr.rel (%p972) target = $region60
    $region59: #{cga_forward.3} parent=5 // pred_region
      %s975 = ssub.s32 %s15, 2
      // Predicated region
      $region61: #{cga_forward.3} parent=59 // pred_check
        %p976 = pneg %p250
      $region62: #{cga_forward.3} parent=59 // pred_check_branch
        %978 = sbr.rel (%p976) target = $region64
      $region63: #{cga_forward.3} parent=59 // pred_region
        %s979 = smul.u32 8, %s27
        %p980 = scmp.lt.s32.totalorder %s26, 1
        %s981 = scalar_select %p980, %s26, 1
        %p982 = scmp.lt.s32.totalorder %s979, 15
        %s983 = scalar_select %p982, %s979, 15
        %s984 = smul.addr %s981, 16
        %s985 = sadd.s32 %s983, %s984
        %s986 = smul.addr %s985, 8
        %s987 = scalar_lea.vmem %s8, %s986
      $region64: #{cga_forward.3} parent=59 // pred_fallthru
        _
    $region60: #{cga_forward.3} parent=5 // pred_fallthru
      _
  $region6: #{cga_forward.3} parent=0 // loop_footer
    %s19 = sadd.s32 1, %s15
  $region7: #{cga_forward.3} parent=0 // loop_footer_branch
    %14 = sbr.rel target = $region3
  $region8: #{cga_forward.3} parent=0 // loop_exit
    _

</llo_original>
